<compile_context>
chip_gen: v5e
topology: v5e:2x2
jax: 0.10.0
libtpu: 0.0.40
codegen_flags: <defaults>
</compile_context>

<pallas_src>
import functools

import numpy as np
import jax
import jax.numpy as jnp
from jax.experimental import pallas as pl
from jax.experimental.pallas import tpu as pltpu


# --------------------------------------------------------------------------- #
# Host-side preprocessing: grouped conv -> block-diagonal dense, BN folding.   #
# --------------------------------------------------------------------------- #
def _expand_grouped_conv(w, groups):
    """(cout, cin//groups, kh, kw) grouped conv weight -> (kh*kw, cout, cin)
    dense block-diagonal per-tap weight (zeros outside each group's block)."""
    w = np.asarray(w, np.float32)
    cout, cpg, kh, kw = w.shape
    cin = cpg * groups
    out_per_group = cout // groups
    full = np.zeros((kh * kw, cout, cin), np.float32)
    for o in range(cout):
        g = o // out_per_group
        # tap t corresponds to (ky, kx) = (t // kw, t % kw)
        full[:, o, g * cpg:(g + 1) * cpg] = w[o].reshape(cpg, kh * kw).T
    return full


def _fold_bn(w_taps, gamma, beta, mean, var, eps=1e-5):
    """Fold inference-mode BatchNorm (running stats) into the expanded conv
    weight and a per-output-channel bias."""
    gamma = np.asarray(gamma, np.float32)
    beta = np.asarray(beta, np.float32)
    mean = np.asarray(mean, np.float32)
    var = np.asarray(var, np.float32)
    scale = gamma / np.sqrt(var + eps)
    bias = beta - mean * scale
    return (w_taps * scale[None, :, None]).astype(np.float32), bias.astype(np.float32)


def _make_tap_masks(batch_tile, H, W):
    """(9, 1, batch_tile*H*W) 0/1 masks: tap t with (dy,dx)=(t//3-1, t%3-1) is
    valid at output pixel p iff the source pixel lies inside the SAME image.
    Implements the 3x3 zero padding and keeps taps correct across image
    boundaries when several images are packed along the lane axis."""
    HW = H * W
    q = np.arange(batch_tile * HW) % HW
    row, col = q // W, q % W
    masks = np.zeros((9, 1, batch_tile * HW), np.float32)
    for t in range(9):
        dy, dx = t // 3 - 1, t % 3 - 1
        ok = (row + dy >= 0) & (row + dy < H) & (col + dx >= 0) & (col + dx < W)
        masks[t, 0] = ok.astype(np.float32)
    return masks


def _pick_batch_tile(n):
    """Largest batch tile that keeps >= 2 grid steps (v7x has 2 TensorCores)."""
    best = 1
    for b in range(1, n + 1):
        if n % b == 0 and n // b >= 2:
            best = b
    return best


# --------------------------------------------------------------------------- #
# Fused Pallas kernel: whole FFBModule forward for one lane-packed batch tile. #
# --------------------------------------------------------------------------- #
def _ffb_kernel(x_ref, w1_ref, w2_ref, w3_ref, w4_ref, w5_ref, b_ref, m_ref,
                o_ref, *, W, lanes, compute_dtype):
    # Per-tap boundary masks, loaded once and reused by both 3x3 convs.
    masks = [m_ref[t] for t in range(9)]                  # each (1, lanes), f32

    def pw_bn_relu(w_ref, h, bias_idx):
        """BN-folded grouped 1x1 conv = one block-diagonal MXU matmul+bias+relu."""
        y = jnp.dot(w_ref[...], h.astype(compute_dtype),
                    preferred_element_type=jnp.float32)
        return jnp.maximum(y + b_ref[bias_idx], 0.0)

    def conv3x3_bn_relu(w_ref, h, bias_idx):
        """BN-folded grouped 3x3 conv: stack the 9 tap-shifted, boundary-masked
        copies of h along the contraction axis -> ONE MXU matmul with K=9*C."""
        taps = []
        for t in range(9):
            dy, dx = t // 3 - 1, t % 3 - 1
            d = dy * W + dx                                # flat lane offset of tap
            s = pltpu.roll(h, shift=(-d) % lanes, axis=1) if d != 0 else h
            if t != 4:                                     # centre mask is all-ones
                s = s * masks[t]
            taps.append(s)
        # f32 concat (8-sublane aligned pieces), single cast, single matmul.
        hs = jnp.concatenate(taps, axis=0).astype(compute_dtype)   # (9*C, lanes)
        y = jnp.dot(w_ref[...], hs, preferred_element_type=jnp.float32)
        return jnp.maximum(y + b_ref[bias_idx], 0.0)

    x = x_ref[...]                                         # (Cin, lanes), f32
    h1 = pw_bn_relu(w1_ref, x, 0)                          # conv1 + bn1 + relu
    h2 = conv3x3_bn_relu(w2_ref, h1, 1)                    # conv2 + bn2 + relu
    h3 = pw_bn_relu(w3_ref, h2, 2) + h1                    # conv3 + bn3 + relu + r1
    h4 = conv3x3_bn_relu(w4_ref, h3, 3) + h2               # conv4 + bn4 + relu + r2
    o_ref[...] = pw_bn_relu(w5_ref, h4, 4)                 # conv5 + bn5 + relu


def _const_spec(shape, single_buffer):
    """BlockSpec for an operand whose block never changes across the grid."""
    index_map = lambda i: (0,) * len(shape)
    if single_buffer:
        # No point double-buffering a block that is fetched exactly once.
        return pl.BlockSpec(shape, index_map, pipeline_mode=pl.Buffered(1))
    return pl.BlockSpec(shape, index_map)


def ffb_forward_pallas(x, params, *, compute_dtype=jnp.bfloat16, batch_tile=None):
    """x: (N, Cin, H, W) f32. params: raw conv weights + BN (gamma,beta,mean,var).

    compute_dtype: dtype of the MXU matmul operands (accumulation is always f32).
    batch_tile:    images packed along the lane axis per grid step (None = auto).
    """
    n, cin, h, w = x.shape
    planes = params["conv1"].shape[0]
    hw = h * w
    assert cin % 4 == 0 and planes % 4 == 0, "groups=4 requires channels % 4 == 0"

    # ---- host-side prep: BN folding, block-diag expansion, tap stacking ------
    w1, b1 = _fold_bn(_expand_grouped_conv(params["conv1"], 4), *params["bn1"])
    w2, b2 = _fold_bn(_expand_grouped_conv(params["conv2"], 2), *params["bn2"])
    w3, b3 = _fold_bn(_expand_grouped_conv(params["conv3"], 4), *params["bn3"])
    w4, b4 = _fold_bn(_expand_grouped_conv(params["conv4"], 2), *params["bn4"])
    w5, b5 = _fold_bn(_expand_grouped_conv(params["conv5"], 4), *params["bn5"])
    w1, w3, w5 = w1[0], w3[0], w5[0]                 # 1x1 convs: single tap
    # 3x3 taps stacked along the contraction axis: (9, cout, cin) -> (cout, 9*cin)
    w2 = w2.transpose(1, 0, 2).reshape(planes, 9 * planes)
    w4 = w4.transpose(1, 0, 2).reshape(planes, 9 * planes)
    biases = np.stack([b1, b2, b3, b4, b5]).reshape(5, planes, 1)

    if batch_tile is None:
        batch_tile = _pick_batch_tile(n)
    assert n % batch_tile == 0
    lanes = batch_tile * hw
    masks = _make_tap_masks(batch_tile, h, w)

    # Lane-pack images: (N, C, HW) -> (C, N*HW); grid step i covers images
    # [i*B, (i+1)*B) as B*HW consecutive lane-dense columns.
    x_packed = jnp.transpose(x.reshape(n, cin, hw), (1, 0, 2)).reshape(cin, n * hw)

    cd = compute_dtype
    args = (x_packed,
            jnp.asarray(w1, cd), jnp.asarray(w2, cd), jnp.asarray(w3, cd),
            jnp.asarray(w4, cd), jnp.asarray(w5, cd),
            jnp.asarray(biases), jnp.asarray(masks))

    kernel = functools.partial(_ffb_kernel, W=w, lanes=lanes,
                               compute_dtype=compute_dtype)

    def build(single_buffer):
        return pl.pallas_call(
            kernel,
            out_shape=jax.ShapeDtypeStruct((planes, n * hw), jnp.float32),
            grid_spec=pltpu.PrefetchScalarGridSpec(
                num_scalar_prefetch=0,
                grid=(n // batch_tile,),
                in_specs=[
                    pl.BlockSpec((cin, lanes), lambda i: (0, i)),      # x slab
                    _const_spec((planes, cin), single_buffer),         # w1 (folded)
                    _const_spec((planes, 9 * planes), single_buffer),  # w2 taps
                    _const_spec((planes, planes), single_buffer),      # w3
                    _const_spec((planes, 9 * planes), single_buffer),  # w4 taps
                    _const_spec((planes, planes), single_buffer),      # w5
                    _const_spec((5, planes, 1), single_buffer),        # bn biases
                    _const_spec((9, 1, lanes), single_buffer),         # tap masks
                ],
                out_specs=pl.BlockSpec((planes, lanes), lambda i: (0, i)),
            ),
            compiler_params=pltpu.CompilerParams(
                dimension_semantics=("parallel",),
                vmem_limit_bytes=32 * 1024 * 1024),
        )

    try:
        out_packed = build(single_buffer=True)(*args)
    except Exception:
        # pl.Buffered(1) unavailable / rejected on this backend: fall back to
        # default double-buffered specs (any genuine error re-raises here).
        out_packed = build(single_buffer=False)(*args)

    return out_packed.reshape(planes, n, hw).transpose(1, 0, 2).reshape(
        n, planes, h, w)


# --------------------------------------------------------------------------- #
# Pure-JAX reference (mirrors the PyTorch module, inference-mode BatchNorm).   #
# --------------------------------------------------------------------------- #
def ffb_forward_reference(x, params, eps=1e-5):
    def conv(h, wgt, groups, padding=0):
        return jax.lax.conv_general_dilated(
            h, wgt, window_strides=(1, 1),
            padding=[(padding, padding), (padding, padding)],
            dimension_numbers=("NCHW", "OIHW", "NCHW"),
            feature_group_count=groups,
            precision=jax.lax.Precision.HIGHEST)

    def bn(h, stats):
        gamma, beta, mean, var = stats
        inv = gamma / jnp.sqrt(var + eps)
        return (h - mean[None, :, None, None]) * inv[None, :, None, None] \
            + beta[None, :, None, None]

    relu = lambda t: jnp.maximum(t, 0.0)
    out = relu(bn(conv(x, params["conv1"], 4), params["bn1"]))
    r1 = out
    out = relu(bn(conv(out, params["conv2"], 2, padding=1), params["bn2"]))
    r2 = out
    out = relu(bn(conv(out, params["conv3"], 4), params["bn3"])) + r1
    out = relu(bn(conv(out, params["conv4"], 2, padding=1), params["bn4"])) + r2
    out = relu(bn(conv(out, params["conv5"], 4), params["bn5"]))
    return out


if __name__ == "__main__":
    key = jax.random.PRNGKey(0)
    N, INPLANES, PLANES, H, W = 2, 4, 8, 16, 16
    ks = jax.random.split(key, 11)

    def bn_stats(k, c):
        k1, k2, k3, k4 = jax.random.split(k, 4)
        gamma = jax.random.uniform(k1, (c,), minval=0.5, maxval=1.5)
        beta = jax.random.normal(k2, (c,)) * 0.1
        mean = jax.random.normal(k3, (c,)) * 0.1
        var = jax.random.uniform(k4, (c,), minval=0.5, maxval=1.5)
        return (gamma, beta, mean, var)

    params = {
        "conv1": jax.random.normal(ks[0], (PLANES, INPLANES // 4, 1, 1)) * 0.5,
        "conv2": jax.random.normal(ks[1], (PLANES, PLANES // 2, 3, 3)) * 0.2,
        "conv3": jax.random.normal(ks[2], (PLANES, PLANES // 4, 1, 1)) * 0.5,
        "conv4": jax.random.normal(ks[3], (PLANES, PLANES // 2, 3, 3)) * 0.2,
        "conv5": jax.random.normal(ks[4], (PLANES, PLANES // 4, 1, 1)) * 0.5,
        "bn1": bn_stats(ks[5], PLANES),
        "bn2": bn_stats(ks[6], PLANES),
        "bn3": bn_stats(ks[7], PLANES),
        "bn4": bn_stats(ks[8], PLANES),
        "bn5": bn_stats(ks[9], PLANES),
    }
    x = jax.random.normal(ks[10], (N, INPLANES, H, W), dtype=jnp.float32)

    ref = ffb_forward_reference(x, params)

    # Exact-parity path: f32 matmuls, one image per grid step (grid = 2).
    out_f32 = jax.block_until_ready(
        ffb_forward_pallas(x, params, compute_dtype=jnp.float32))
    assert out_f32.shape == (N, PLANES, H, W)
    err = float(jnp.max(jnp.abs(out_f32 - ref)))
    assert jnp.allclose(out_f32, ref, atol=5e-3, rtol=5e-3), f"f32 max abs err {err}"

    # Lane-packing path: both images packed into one 512-lane grid step.
    out_pk = jax.block_until_ready(
        ffb_forward_pallas(x, params, compute_dtype=jnp.float32, batch_tile=2))
    err = float(jnp.max(jnp.abs(out_pk - ref)))
    assert jnp.allclose(out_pk, ref, atol=5e-3, rtol=5e-3), f"packed max abs err {err}"

    # Fast (default) path: bf16 MXU matmuls with f32 accumulation -- loose parity
    # against the f32 reference (bf16 operand rounding only).
    out_bf16 = jax.block_until_ready(ffb_forward_pallas(x, params))
    err = float(jnp.max(jnp.abs(out_bf16 - ref)))
    assert jnp.allclose(out_bf16, ref, atol=1e-1, rtol=1e-1), f"bf16 max abs err {err}"

    print("KERNEL_OK")
</pallas_src>

<mosaic_0001>
module attributes {stable_mosaic.version = 11 : i64} {
  func.func @_ffb_kernel(%arg0: i32, %arg1: memref<4x256xf32, #tpu.memory_space<vmem>>, %arg2: memref<8x4xf32, #tpu.memory_space<vmem>>, %arg3: memref<8x72xf32, #tpu.memory_space<vmem>>, %arg4: memref<8x8xf32, #tpu.memory_space<vmem>>, %arg5: memref<8x72xf32, #tpu.memory_space<vmem>>, %arg6: memref<8x8xf32, #tpu.memory_space<vmem>>, %arg7: memref<5x8x1xf32, #tpu.memory_space<vmem>>, %arg8: memref<9x1x256xf32, #tpu.memory_space<vmem>>, %arg9: memref<8x256xf32, #tpu.memory_space<vmem>>) attributes {dimension_semantics = [#tpu.dimension_semantics<parallel>], iteration_bounds = array<i64: 2>, scalar_prefetch = 0 : i64, scratch_operands = 0 : i64, tpu.core_type = #tpu.core_type<tc>, window_params = [{transform_indices = @transform_0, window_bounds = array<i64: 4, 256>}, {pipeline_mode = #tpu.pipeline_mode<synchronous>, transform_indices = @transform_1, window_bounds = array<i64: 8, 4>}, {pipeline_mode = #tpu.pipeline_mode<synchronous>, transform_indices = @transform_2, window_bounds = array<i64: 8, 72>}, {pipeline_mode = #tpu.pipeline_mode<synchronous>, transform_indices = @transform_3, window_bounds = array<i64: 8, 8>}, {pipeline_mode = #tpu.pipeline_mode<synchronous>, transform_indices = @transform_4, window_bounds = array<i64: 8, 72>}, {pipeline_mode = #tpu.pipeline_mode<synchronous>, transform_indices = @transform_5, window_bounds = array<i64: 8, 8>}, {pipeline_mode = #tpu.pipeline_mode<synchronous>, transform_indices = @transform_6, window_bounds = array<i64: 5, 8, 1>}, {pipeline_mode = #tpu.pipeline_mode<synchronous>, transform_indices = @transform_7, window_bounds = array<i64: 9, 1, 256>}, {transform_indices = @transform_8, window_bounds = array<i64: 8, 256>}]} {
    %c0 = arith.constant 0 : index
    %c0_0 = arith.constant 0 : index
    %c0_1 = arith.constant 0 : index
    %0 = vector.load %arg8[%c0, %c0_0, %c0_1] : memref<9x1x256xf32, #tpu.memory_space<vmem>>, vector<1x1x256xf32>
    %1 = vector.shape_cast %0 : vector<1x1x256xf32> to vector<1x256xf32>
    %c1 = arith.constant 1 : index
    %c0_2 = arith.constant 0 : index
    %c0_3 = arith.constant 0 : index
    %2 = vector.load %arg8[%c1, %c0_2, %c0_3] : memref<9x1x256xf32, #tpu.memory_space<vmem>>, vector<1x1x256xf32>
    %3 = vector.shape_cast %2 : vector<1x1x256xf32> to vector<1x256xf32>
    %c2 = arith.constant 2 : index
    %c0_4 = arith.constant 0 : index
    %c0_5 = arith.constant 0 : index
    %4 = vector.load %arg8[%c2, %c0_4, %c0_5] : memref<9x1x256xf32, #tpu.memory_space<vmem>>, vector<1x1x256xf32>
    %5 = vector.shape_cast %4 : vector<1x1x256xf32> to vector<1x256xf32>
    %c3 = arith.constant 3 : index
    %c0_6 = arith.constant 0 : index
    %c0_7 = arith.constant 0 : index
    %6 = vector.load %arg8[%c3, %c0_6, %c0_7] : memref<9x1x256xf32, #tpu.memory_space<vmem>>, vector<1x1x256xf32>
    %7 = vector.shape_cast %6 : vector<1x1x256xf32> to vector<1x256xf32>
    %c5 = arith.constant 5 : index
    %c0_8 = arith.constant 0 : index
    %c0_9 = arith.constant 0 : index
    %8 = vector.load %arg8[%c5, %c0_8, %c0_9] : memref<9x1x256xf32, #tpu.memory_space<vmem>>, vector<1x1x256xf32>
    %9 = vector.shape_cast %8 : vector<1x1x256xf32> to vector<1x256xf32>
    %c6 = arith.constant 6 : index
    %c0_10 = arith.constant 0 : index
    %c0_11 = arith.constant 0 : index
    %10 = vector.load %arg8[%c6, %c0_10, %c0_11] : memref<9x1x256xf32, #tpu.memory_space<vmem>>, vector<1x1x256xf32>
    %11 = vector.shape_cast %10 : vector<1x1x256xf32> to vector<1x256xf32>
    %c7 = arith.constant 7 : index
    %c0_12 = arith.constant 0 : index
    %c0_13 = arith.constant 0 : index
    %12 = vector.load %arg8[%c7, %c0_12, %c0_13] : memref<9x1x256xf32, #tpu.memory_space<vmem>>, vector<1x1x256xf32>
    %13 = vector.shape_cast %12 : vector<1x1x256xf32> to vector<1x256xf32>
    %c8 = arith.constant 8 : index
    %c0_14 = arith.constant 0 : index
    %c0_15 = arith.constant 0 : index
    %14 = vector.load %arg8[%c8, %c0_14, %c0_15] : memref<9x1x256xf32, #tpu.memory_space<vmem>>, vector<1x1x256xf32>
    %15 = vector.shape_cast %14 : vector<1x1x256xf32> to vector<1x256xf32>
    %c0_16 = arith.constant 0 : index
    %c0_17 = arith.constant 0 : index
    %16 = vector.load %arg1[%c0_16, %c0_17] : memref<4x256xf32, #tpu.memory_space<vmem>>, vector<4x256xf32>
    %c0_18 = arith.constant 0 : index
    %c0_19 = arith.constant 0 : index
    %17 = vector.load %arg2[%c0_18, %c0_19] : memref<8x4xf32, #tpu.memory_space<vmem>>, vector<8x4xf32>
    %cst = arith.constant dense<0.000000e+00> : vector<8x256xf32>
    %18 = tpu.matmul %17, %16, %cst {dimension_numbers = #tpu.dot_dimension_numbers<[1], [0], [0], [1], [0, 0, 1, 1], [], []>} : vector<8x4xf32>, vector<4x256xf32>, vector<8x256xf32> -> vector<8x256xf32>
    %c0_20 = arith.constant 0 : index
    %c0_21 = arith.constant 0 : index
    %c0_22 = arith.constant 0 : index
    %19 = vector.load %arg7[%c0_20, %c0_21, %c0_22] : memref<5x8x1xf32, #tpu.memory_space<vmem>>, vector<1x8x1xf32>
    %20 = vector.shape_cast %19 : vector<1x8x1xf32> to vector<8x1xf32>
    %21 = vector.broadcast %20 : vector<8x1xf32> to vector<8x256xf32>
    %22 = arith.addf %18, %21 : vector<8x256xf32>
    %cst_23 = arith.constant 0.000000e+00 : f32
    %23 = vector.broadcast %cst_23 : f32 to vector<8x256xf32>
    %24 = arith.maximumf %22, %23 : vector<8x256xf32>
    %c17_i32 = arith.constant 17 : i32
    %25 = tpu.dynamic_rotate %24 by %c17_i32 dim 1 : vector<8x256xf32>, i32 -> vector<8x256xf32>
    %26 = vector.broadcast %1 : vector<1x256xf32> to vector<8x256xf32>
    %27 = arith.mulf %25, %26 : vector<8x256xf32>
    %c16_i32 = arith.constant 16 : i32
    %28 = tpu.dynamic_rotate %24 by %c16_i32 dim 1 : vector<8x256xf32>, i32 -> vector<8x256xf32>
    %29 = vector.broadcast %3 : vector<1x256xf32> to vector<8x256xf32>
    %30 = arith.mulf %28, %29 : vector<8x256xf32>
    %c15_i32 = arith.constant 15 : i32
    %31 = tpu.dynamic_rotate %24 by %c15_i32 dim 1 : vector<8x256xf32>, i32 -> vector<8x256xf32>
    %32 = vector.broadcast %5 : vector<1x256xf32> to vector<8x256xf32>
    %33 = arith.mulf %31, %32 : vector<8x256xf32>
    %c1_i32 = arith.constant 1 : i32
    %34 = tpu.dynamic_rotate %24 by %c1_i32 dim 1 : vector<8x256xf32>, i32 -> vector<8x256xf32>
    %35 = vector.broadcast %7 : vector<1x256xf32> to vector<8x256xf32>
    %36 = arith.mulf %34, %35 : vector<8x256xf32>
    %c255_i32 = arith.constant 255 : i32
    %37 = tpu.dynamic_rotate %24 by %c255_i32 dim 1 : vector<8x256xf32>, i32 -> vector<8x256xf32>
    %38 = vector.broadcast %9 : vector<1x256xf32> to vector<8x256xf32>
    %39 = arith.mulf %37, %38 : vector<8x256xf32>
    %c241_i32 = arith.constant 241 : i32
    %40 = tpu.dynamic_rotate %24 by %c241_i32 dim 1 : vector<8x256xf32>, i32 -> vector<8x256xf32>
    %41 = vector.broadcast %11 : vector<1x256xf32> to vector<8x256xf32>
    %42 = arith.mulf %40, %41 : vector<8x256xf32>
    %c240_i32 = arith.constant 240 : i32
    %43 = tpu.dynamic_rotate %24 by %c240_i32 dim 1 : vector<8x256xf32>, i32 -> vector<8x256xf32>
    %44 = vector.broadcast %13 : vector<1x256xf32> to vector<8x256xf32>
    %45 = arith.mulf %43, %44 : vector<8x256xf32>
    %c239_i32 = arith.constant 239 : i32
    %46 = tpu.dynamic_rotate %24 by %c239_i32 dim 1 : vector<8x256xf32>, i32 -> vector<8x256xf32>
    %47 = vector.broadcast %15 : vector<1x256xf32> to vector<8x256xf32>
    %48 = arith.mulf %46, %47 : vector<8x256xf32>
    %49 = tpu.concatenate %27, %30, %33, %36, %24, %39, %42, %45, %48 in 0 : vector<8x256xf32>, vector<8x256xf32>, vector<8x256xf32>, vector<8x256xf32>, vector<8x256xf32>, vector<8x256xf32>, vector<8x256xf32>, vector<8x256xf32>, vector<8x256xf32> -> vector<72x256xf32>
    %c0_24 = arith.constant 0 : index
    %c0_25 = arith.constant 0 : index
    %50 = vector.load %arg3[%c0_24, %c0_25] : memref<8x72xf32, #tpu.memory_space<vmem>>, vector<8x72xf32>
    %cst_26 = arith.constant dense<0.000000e+00> : vector<8x256xf32>
    %51 = tpu.matmul %50, %49, %cst_26 {dimension_numbers = #tpu.dot_dimension_numbers<[1], [0], [0], [1], [0, 0, 1, 1], [], []>} : vector<8x72xf32>, vector<72x256xf32>, vector<8x256xf32> -> vector<8x256xf32>
    %c1_27 = arith.constant 1 : index
    %c0_28 = arith.constant 0 : index
    %c0_29 = arith.constant 0 : index
    %52 = vector.load %arg7[%c1_27, %c0_28, %c0_29] : memref<5x8x1xf32, #tpu.memory_space<vmem>>, vector<1x8x1xf32>
    %53 = vector.shape_cast %52 : vector<1x8x1xf32> to vector<8x1xf32>
    %54 = vector.broadcast %53 : vector<8x1xf32> to vector<8x256xf32>
    %55 = arith.addf %51, %54 : vector<8x256xf32>
    %cst_30 = arith.constant 0.000000e+00 : f32
    %56 = vector.broadcast %cst_30 : f32 to vector<8x256xf32>
    %57 = arith.maximumf %55, %56 : vector<8x256xf32>
    %c0_31 = arith.constant 0 : index
    %c0_32 = arith.constant 0 : index
    %58 = vector.load %arg4[%c0_31, %c0_32] : memref<8x8xf32, #tpu.memory_space<vmem>>, vector<8x8xf32>
    %cst_33 = arith.constant dense<0.000000e+00> : vector<8x256xf32>
    %59 = tpu.matmul %58, %57, %cst_33 {dimension_numbers = #tpu.dot_dimension_numbers<[1], [0], [0], [1], [0, 0, 1, 1], [], []>} : vector<8x8xf32>, vector<8x256xf32>, vector<8x256xf32> -> vector<8x256xf32>
    %c2_34 = arith.constant 2 : index
    %c0_35 = arith.constant 0 : index
    %c0_36 = arith.constant 0 : index
    %60 = vector.load %arg7[%c2_34, %c0_35, %c0_36] : memref<5x8x1xf32, #tpu.memory_space<vmem>>, vector<1x8x1xf32>
    %61 = vector.shape_cast %60 : vector<1x8x1xf32> to vector<8x1xf32>
    %62 = vector.broadcast %61 : vector<8x1xf32> to vector<8x256xf32>
    %63 = arith.addf %59, %62 : vector<8x256xf32>
    %cst_37 = arith.constant 0.000000e+00 : f32
    %64 = vector.broadcast %cst_37 : f32 to vector<8x256xf32>
    %65 = arith.maximumf %63, %64 : vector<8x256xf32>
    %66 = arith.addf %65, %24 : vector<8x256xf32>
    %c17_i32_38 = arith.constant 17 : i32
    %67 = tpu.dynamic_rotate %66 by %c17_i32_38 dim 1 : vector<8x256xf32>, i32 -> vector<8x256xf32>
    %68 = vector.broadcast %1 : vector<1x256xf32> to vector<8x256xf32>
    %69 = arith.mulf %67, %68 : vector<8x256xf32>
    %c16_i32_39 = arith.constant 16 : i32
    %70 = tpu.dynamic_rotate %66 by %c16_i32_39 dim 1 : vector<8x256xf32>, i32 -> vector<8x256xf32>
    %71 = vector.broadcast %3 : vector<1x256xf32> to vector<8x256xf32>
    %72 = arith.mulf %70, %71 : vector<8x256xf32>
    %c15_i32_40 = arith.constant 15 : i32
    %73 = tpu.dynamic_rotate %66 by %c15_i32_40 dim 1 : vector<8x256xf32>, i32 -> vector<8x256xf32>
    %74 = vector.broadcast %5 : vector<1x256xf32> to vector<8x256xf32>
    %75 = arith.mulf %73, %74 : vector<8x256xf32>
    %c1_i32_41 = arith.constant 1 : i32
    %76 = tpu.dynamic_rotate %66 by %c1_i32_41 dim 1 : vector<8x256xf32>, i32 -> vector<8x256xf32>
    %77 = vector.broadcast %7 : vector<1x256xf32> to vector<8x256xf32>
    %78 = arith.mulf %76, %77 : vector<8x256xf32>
    %c255_i32_42 = arith.constant 255 : i32
    %79 = tpu.dynamic_rotate %66 by %c255_i32_42 dim 1 : vector<8x256xf32>, i32 -> vector<8x256xf32>
    %80 = vector.broadcast %9 : vector<1x256xf32> to vector<8x256xf32>
    %81 = arith.mulf %79, %80 : vector<8x256xf32>
    %c241_i32_43 = arith.constant 241 : i32
    %82 = tpu.dynamic_rotate %66 by %c241_i32_43 dim 1 : vector<8x256xf32>, i32 -> vector<8x256xf32>
    %83 = vector.broadcast %11 : vector<1x256xf32> to vector<8x256xf32>
    %84 = arith.mulf %82, %83 : vector<8x256xf32>
    %c240_i32_44 = arith.constant 240 : i32
    %85 = tpu.dynamic_rotate %66 by %c240_i32_44 dim 1 : vector<8x256xf32>, i32 -> vector<8x256xf32>
    %86 = vector.broadcast %13 : vector<1x256xf32> to vector<8x256xf32>
    %87 = arith.mulf %85, %86 : vector<8x256xf32>
    %c239_i32_45 = arith.constant 239 : i32
    %88 = tpu.dynamic_rotate %66 by %c239_i32_45 dim 1 : vector<8x256xf32>, i32 -> vector<8x256xf32>
    %89 = vector.broadcast %15 : vector<1x256xf32> to vector<8x256xf32>
    %90 = arith.mulf %88, %89 : vector<8x256xf32>
    %91 = tpu.concatenate %69, %72, %75, %78, %66, %81, %84, %87, %90 in 0 : vector<8x256xf32>, vector<8x256xf32>, vector<8x256xf32>, vector<8x256xf32>, vector<8x256xf32>, vector<8x256xf32>, vector<8x256xf32>, vector<8x256xf32>, vector<8x256xf32> -> vector<72x256xf32>
    %c0_46 = arith.constant 0 : index
    %c0_47 = arith.constant 0 : index
    %92 = vector.load %arg5[%c0_46, %c0_47] : memref<8x72xf32, #tpu.memory_space<vmem>>, vector<8x72xf32>
    %cst_48 = arith.constant dense<0.000000e+00> : vector<8x256xf32>
    %93 = tpu.matmul %92, %91, %cst_48 {dimension_numbers = #tpu.dot_dimension_numbers<[1], [0], [0], [1], [0, 0, 1, 1], [], []>} : vector<8x72xf32>, vector<72x256xf32>, vector<8x256xf32> -> vector<8x256xf32>
    %c3_49 = arith.constant 3 : index
    %c0_50 = arith.constant 0 : index
    %c0_51 = arith.constant 0 : index
    %94 = vector.load %arg7[%c3_49, %c0_50, %c0_51] : memref<5x8x1xf32, #tpu.memory_space<vmem>>, vector<1x8x1xf32>
    %95 = vector.shape_cast %94 : vector<1x8x1xf32> to vector<8x1xf32>
    %96 = vector.broadcast %95 : vector<8x1xf32> to vector<8x256xf32>
    %97 = arith.addf %93, %96 : vector<8x256xf32>
    %cst_52 = arith.constant 0.000000e+00 : f32
    %98 = vector.broadcast %cst_52 : f32 to vector<8x256xf32>
    %99 = arith.maximumf %97, %98 : vector<8x256xf32>
    %100 = arith.addf %99, %57 : vector<8x256xf32>
    %c0_53 = arith.constant 0 : index
    %c0_54 = arith.constant 0 : index
    %101 = vector.load %arg6[%c0_53, %c0_54] : memref<8x8xf32, #tpu.memory_space<vmem>>, vector<8x8xf32>
    %cst_55 = arith.constant dense<0.000000e+00> : vector<8x256xf32>
    %102 = tpu.matmul %101, %100, %cst_55 {dimension_numbers = #tpu.dot_dimension_numbers<[1], [0], [0], [1], [0, 0, 1, 1], [], []>} : vector<8x8xf32>, vector<8x256xf32>, vector<8x256xf32> -> vector<8x256xf32>
    %c4 = arith.constant 4 : index
    %c0_56 = arith.constant 0 : index
    %c0_57 = arith.constant 0 : index
    %103 = vector.load %arg7[%c4, %c0_56, %c0_57] : memref<5x8x1xf32, #tpu.memory_space<vmem>>, vector<1x8x1xf32>
    %104 = vector.shape_cast %103 : vector<1x8x1xf32> to vector<8x1xf32>
    %105 = vector.broadcast %104 : vector<8x1xf32> to vector<8x256xf32>
    %106 = arith.addf %102, %105 : vector<8x256xf32>
    %cst_58 = arith.constant 0.000000e+00 : f32
    %107 = vector.broadcast %cst_58 : f32 to vector<8x256xf32>
    %108 = arith.maximumf %106, %107 : vector<8x256xf32>
    %c0_59 = arith.constant 0 : index
    %c0_60 = arith.constant 0 : index
    %109 = vector.load %arg9[%c0_59, %c0_60] : memref<8x256xf32, #tpu.memory_space<vmem>>, vector<8x256xf32>
    tpu.vector_store %arg9[%c0_59, %c0_60], %108 {strides = array<i32>} : memref<8x256xf32, #tpu.memory_space<vmem>>, vector<8x256xf32>,
    return
  }
  func.func @transform_0(%arg0: i32) -> (i32, i32) {
    %c0_i32 = arith.constant 0 : i32
    %c0_i32_0 = arith.constant 0 : i32
    return %c0_i32, %arg0 : i32, i32
  }
  func.func @transform_1(%arg0: i32) -> (i32, i32) {
    %c0_i32 = arith.constant 0 : i32
    %c0_i32_0 = arith.constant 0 : i32
    %c0_i32_1 = arith.constant 0 : i32
    return %c0_i32, %c0_i32_0 : i32, i32
  }
  func.func @transform_2(%arg0: i32) -> (i32, i32) {
    %c0_i32 = arith.constant 0 : i32
    %c0_i32_0 = arith.constant 0 : i32
    %c0_i32_1 = arith.constant 0 : i32
    return %c0_i32, %c0_i32_0 : i32, i32
  }
  func.func @transform_3(%arg0: i32) -> (i32, i32) {
    %c0_i32 = arith.constant 0 : i32
    %c0_i32_0 = arith.constant 0 : i32
    %c0_i32_1 = arith.constant 0 : i32
    return %c0_i32, %c0_i32_0 : i32, i32
  }
  func.func @transform_4(%arg0: i32) -> (i32, i32) {
    %c0_i32 = arith.constant 0 : i32
    %c0_i32_0 = arith.constant 0 : i32
    %c0_i32_1 = arith.constant 0 : i32
    return %c0_i32, %c0_i32_0 : i32, i32
  }
  func.func @transform_5(%arg0: i32) -> (i32, i32) {
    %c0_i32 = arith.constant 0 : i32
    %c0_i32_0 = arith.constant 0 : i32
    %c0_i32_1 = arith.constant 0 : i32
    return %c0_i32, %c0_i32_0 : i32, i32
  }
  func.func @transform_6(%arg0: i32) -> (i32, i32, i32) {
    %c0_i32 = arith.constant 0 : i32
    %c0_i32_0 = arith.constant 0 : i32
    %c0_i32_1 = arith.constant 0 : i32
    %c0_i32_2 = arith.constant 0 : i32
    return %c0_i32, %c0_i32_0, %c0_i32_1 : i32, i32, i32
  }
  func.func @transform_7(%arg0: i32) -> (i32, i32, i32) {
    %c0_i32 = arith.constant 0 : i32
    %c0_i32_0 = arith.constant 0 : i32
    %c0_i32_1 = arith.constant 0 : i32
    %c0_i32_2 = arith.constant 0 : i32
    return %c0_i32, %c0_i32_0, %c0_i32_1 : i32, i32, i32
  }
  func.func @transform_8(%arg0: i32) -> (i32, i32) {
    %c0_i32 = arith.constant 0 : i32
    %c0_i32_0 = arith.constant 0 : i32
    return %c0_i32, %arg0 : i32, i32
  }
}

module attributes {stable_mosaic.version = 11 : i64} {
  func.func @_ffb_kernel(%arg0: i32, %arg1: memref<4x256xf32, #tpu.memory_space<vmem>>, %arg2: memref<8x4xf32, #tpu.memory_space<vmem>>, %arg3: memref<8x72xf32, #tpu.memory_space<vmem>>, %arg4: memref<8x8xf32, #tpu.memory_space<vmem>>, %arg5: memref<8x72xf32, #tpu.memory_space<vmem>>, %arg6: memref<8x8xf32, #tpu.memory_space<vmem>>, %arg7: memref<5x8x1xf32, #tpu.memory_space<vmem>>, %arg8: memref<9x1x256xf32, #tpu.memory_space<vmem>>, %arg9: memref<8x256xf32, #tpu.memory_space<vmem>>) attributes {dimension_semantics = [#tpu.dimension_semantics<parallel>], iteration_bounds = array<i64: 2>, scalar_prefetch = 0 : i64, scratch_operands = 0 : i64, tpu.core_type = #tpu.core_type<tc>, window_params = [{transform_indices = @transform_0, window_bounds = array<i64: 4, 256>}, {pipeline_mode = #tpu.pipeline_mode<synchronous>, transform_indices = @transform_1, window_bounds = array<i64: 8, 4>}, {pipeline_mode = #tpu.pipeline_mode<synchronous>, transform_indices = @transform_2, window_bounds = array<i64: 8, 72>}, {pipeline_mode = #tpu.pipeline_mode<synchronous>, transform_indices = @transform_3, window_bounds = array<i64: 8, 8>}, {pipeline_mode = #tpu.pipeline_mode<synchronous>, transform_indices = @transform_4, window_bounds = array<i64: 8, 72>}, {pipeline_mode = #tpu.pipeline_mode<synchronous>, transform_indices = @transform_5, window_bounds = array<i64: 8, 8>}, {pipeline_mode = #tpu.pipeline_mode<synchronous>, transform_indices = @transform_6, window_bounds = array<i64: 5, 8, 1>}, {pipeline_mode = #tpu.pipeline_mode<synchronous>, transform_indices = @transform_7, window_bounds = array<i64: 9, 1, 256>}, {transform_indices = @transform_8, window_bounds = array<i64: 8, 256>}]} {
    %c0 = arith.constant 0 : index
    %c0_0 = arith.constant 0 : index
    %c0_1 = arith.constant 0 : index
    %0 = vector.load %arg8[%c0, %c0_0, %c0_1] : memref<9x1x256xf32, #tpu.memory_space<vmem>>, vector<1x1x256xf32>
    %1 = vector.shape_cast %0 : vector<1x1x256xf32> to vector<1x256xf32>
    %c1 = arith.constant 1 : index
    %c0_2 = arith.constant 0 : index
    %c0_3 = arith.constant 0 : index
    %2 = vector.load %arg8[%c1, %c0_2, %c0_3] : memref<9x1x256xf32, #tpu.memory_space<vmem>>, vector<1x1x256xf32>
    %3 = vector.shape_cast %2 : vector<1x1x256xf32> to vector<1x256xf32>
    %c2 = arith.constant 2 : index
    %c0_4 = arith.constant 0 : index
    %c0_5 = arith.constant 0 : index
    %4 = vector.load %arg8[%c2, %c0_4, %c0_5] : memref<9x1x256xf32, #tpu.memory_space<vmem>>, vector<1x1x256xf32>
    %5 = vector.shape_cast %4 : vector<1x1x256xf32> to vector<1x256xf32>
    %c3 = arith.constant 3 : index
    %c0_6 = arith.constant 0 : index
    %c0_7 = arith.constant 0 : index
    %6 = vector.load %arg8[%c3, %c0_6, %c0_7] : memref<9x1x256xf32, #tpu.memory_space<vmem>>, vector<1x1x256xf32>
    %7 = vector.shape_cast %6 : vector<1x1x256xf32> to vector<1x256xf32>
    %c5 = arith.constant 5 : index
    %c0_8 = arith.constant 0 : index
    %c0_9 = arith.constant 0 : index
    %8 = vector.load %arg8[%c5, %c0_8, %c0_9] : memref<9x1x256xf32, #tpu.memory_space<vmem>>, vector<1x1x256xf32>
    %9 = vector.shape_cast %8 : vector<1x1x256xf32> to vector<1x256xf32>
    %c6 = arith.constant 6 : index
    %c0_10 = arith.constant 0 : index
    %c0_11 = arith.constant 0 : index
    %10 = vector.load %arg8[%c6, %c0_10, %c0_11] : memref<9x1x256xf32, #tpu.memory_space<vmem>>, vector<1x1x256xf32>
    %11 = vector.shape_cast %10 : vector<1x1x256xf32> to vector<1x256xf32>
    %c7 = arith.constant 7 : index
    %c0_12 = arith.constant 0 : index
    %c0_13 = arith.constant 0 : index
    %12 = vector.load %arg8[%c7, %c0_12, %c0_13] : memref<9x1x256xf32, #tpu.memory_space<vmem>>, vector<1x1x256xf32>
    %13 = vector.shape_cast %12 : vector<1x1x256xf32> to vector<1x256xf32>
    %c8 = arith.constant 8 : index
    %c0_14 = arith.constant 0 : index
    %c0_15 = arith.constant 0 : index
    %14 = vector.load %arg8[%c8, %c0_14, %c0_15] : memref<9x1x256xf32, #tpu.memory_space<vmem>>, vector<1x1x256xf32>
    %15 = vector.shape_cast %14 : vector<1x1x256xf32> to vector<1x256xf32>
    %c0_16 = arith.constant 0 : index
    %c0_17 = arith.constant 0 : index
    %16 = vector.load %arg1[%c0_16, %c0_17] : memref<4x256xf32, #tpu.memory_space<vmem>>, vector<4x256xf32>
    %c0_18 = arith.constant 0 : index
    %c0_19 = arith.constant 0 : index
    %17 = vector.load %arg2[%c0_18, %c0_19] : memref<8x4xf32, #tpu.memory_space<vmem>>, vector<8x4xf32>
    %cst = arith.constant dense<0.000000e+00> : vector<8x256xf32>
    %18 = tpu.matmul %17, %16, %cst {dimension_numbers = #tpu.dot_dimension_numbers<[1], [0], [0], [1], [0, 0, 1, 1], [], []>} : vector<8x4xf32>, vector<4x256xf32>, vector<8x256xf32> -> vector<8x256xf32>
    %c0_20 = arith.constant 0 : index
    %c0_21 = arith.constant 0 : index
    %c0_22 = arith.constant 0 : index
    %19 = vector.load %arg7[%c0_20, %c0_21, %c0_22] : memref<5x8x1xf32, #tpu.memory_space<vmem>>, vector<1x8x1xf32>
    %20 = vector.shape_cast %19 : vector<1x8x1xf32> to vector<8x1xf32>
    %21 = vector.broadcast %20 : vector<8x1xf32> to vector<8x256xf32>
    %22 = arith.addf %18, %21 : vector<8x256xf32>
    %cst_23 = arith.constant 0.000000e+00 : f32
    %23 = vector.broadcast %cst_23 : f32 to vector<8x256xf32>
    %24 = arith.maximumf %22, %23 : vector<8x256xf32>
    %c17_i32 = arith.constant 17 : i32
    %25 = tpu.dynamic_rotate %24 by %c17_i32 dim 1 : vector<8x256xf32>, i32 -> vector<8x256xf32>
    %26 = vector.broadcast %1 : vector<1x256xf32> to vector<8x256xf32>
    %27 = arith.mulf %25, %26 : vector<8x256xf32>
    %c16_i32 = arith.constant 16 : i32
    %28 = tpu.dynamic_rotate %24 by %c16_i32 dim 1 : vector<8x256xf32>, i32 -> vector<8x256xf32>
    %29 = vector.broadcast %3 : vector<1x256xf32> to vector<8x256xf32>
    %30 = arith.mulf %28, %29 : vector<8x256xf32>
    %c15_i32 = arith.constant 15 : i32
    %31 = tpu.dynamic_rotate %24 by %c15_i32 dim 1 : vector<8x256xf32>, i32 -> vector<8x256xf32>
    %32 = vector.broadcast %5 : vector<1x256xf32> to vector<8x256xf32>
    %33 = arith.mulf %31, %32 : vector<8x256xf32>
    %c1_i32 = arith.constant 1 : i32
    %34 = tpu.dynamic_rotate %24 by %c1_i32 dim 1 : vector<8x256xf32>, i32 -> vector<8x256xf32>
    %35 = vector.broadcast %7 : vector<1x256xf32> to vector<8x256xf32>
    %36 = arith.mulf %34, %35 : vector<8x256xf32>
    %c255_i32 = arith.constant 255 : i32
    %37 = tpu.dynamic_rotate %24 by %c255_i32 dim 1 : vector<8x256xf32>, i32 -> vector<8x256xf32>
    %38 = vector.broadcast %9 : vector<1x256xf32> to vector<8x256xf32>
    %39 = arith.mulf %37, %38 : vector<8x256xf32>
    %c241_i32 = arith.constant 241 : i32
    %40 = tpu.dynamic_rotate %24 by %c241_i32 dim 1 : vector<8x256xf32>, i32 -> vector<8x256xf32>
    %41 = vector.broadcast %11 : vector<1x256xf32> to vector<8x256xf32>
    %42 = arith.mulf %40, %41 : vector<8x256xf32>
    %c240_i32 = arith.constant 240 : i32
    %43 = tpu.dynamic_rotate %24 by %c240_i32 dim 1 : vector<8x256xf32>, i32 -> vector<8x256xf32>
    %44 = vector.broadcast %13 : vector<1x256xf32> to vector<8x256xf32>
    %45 = arith.mulf %43, %44 : vector<8x256xf32>
    %c239_i32 = arith.constant 239 : i32
    %46 = tpu.dynamic_rotate %24 by %c239_i32 dim 1 : vector<8x256xf32>, i32 -> vector<8x256xf32>
    %47 = vector.broadcast %15 : vector<1x256xf32> to vector<8x256xf32>
    %48 = arith.mulf %46, %47 : vector<8x256xf32>
    %49 = tpu.concatenate %27, %30, %33, %36, %24, %39, %42, %45, %48 in 0 : vector<8x256xf32>, vector<8x256xf32>, vector<8x256xf32>, vector<8x256xf32>, vector<8x256xf32>, vector<8x256xf32>, vector<8x256xf32>, vector<8x256xf32>, vector<8x256xf32> -> vector<72x256xf32>
    %c0_24 = arith.constant 0 : index
    %c0_25 = arith.constant 0 : index
    %50 = vector.load %arg3[%c0_24, %c0_25] : memref<8x72xf32, #tpu.memory_space<vmem>>, vector<8x72xf32>
    %cst_26 = arith.constant dense<0.000000e+00> : vector<8x256xf32>
    %51 = tpu.matmul %50, %49, %cst_26 {dimension_numbers = #tpu.dot_dimension_numbers<[1], [0], [0], [1], [0, 0, 1, 1], [], []>} : vector<8x72xf32>, vector<72x256xf32>, vector<8x256xf32> -> vector<8x256xf32>
    %c1_27 = arith.constant 1 : index
    %c0_28 = arith.constant 0 : index
    %c0_29 = arith.constant 0 : index
    %52 = vector.load %arg7[%c1_27, %c0_28, %c0_29] : memref<5x8x1xf32, #tpu.memory_space<vmem>>, vector<1x8x1xf32>
    %53 = vector.shape_cast %52 : vector<1x8x1xf32> to vector<8x1xf32>
    %54 = vector.broadcast %53 : vector<8x1xf32> to vector<8x256xf32>
    %55 = arith.addf %51, %54 : vector<8x256xf32>
    %cst_30 = arith.constant 0.000000e+00 : f32
    %56 = vector.broadcast %cst_30 : f32 to vector<8x256xf32>
    %57 = arith.maximumf %55, %56 : vector<8x256xf32>
    %c0_31 = arith.constant 0 : index
    %c0_32 = arith.constant 0 : index
    %58 = vector.load %arg4[%c0_31, %c0_32] : memref<8x8xf32, #tpu.memory_space<vmem>>, vector<8x8xf32>
    %cst_33 = arith.constant dense<0.000000e+00> : vector<8x256xf32>
    %59 = tpu.matmul %58, %57, %cst_33 {dimension_numbers = #tpu.dot_dimension_numbers<[1], [0], [0], [1], [0, 0, 1, 1], [], []>} : vector<8x8xf32>, vector<8x256xf32>, vector<8x256xf32> -> vector<8x256xf32>
    %c2_34 = arith.constant 2 : index
    %c0_35 = arith.constant 0 : index
    %c0_36 = arith.constant 0 : index
    %60 = vector.load %arg7[%c2_34, %c0_35, %c0_36] : memref<5x8x1xf32, #tpu.memory_space<vmem>>, vector<1x8x1xf32>
    %61 = vector.shape_cast %60 : vector<1x8x1xf32> to vector<8x1xf32>
    %62 = vector.broadcast %61 : vector<8x1xf32> to vector<8x256xf32>
    %63 = arith.addf %59, %62 : vector<8x256xf32>
    %cst_37 = arith.constant 0.000000e+00 : f32
    %64 = vector.broadcast %cst_37 : f32 to vector<8x256xf32>
    %65 = arith.maximumf %63, %64 : vector<8x256xf32>
    %66 = arith.addf %65, %24 : vector<8x256xf32>
    %c17_i32_38 = arith.constant 17 : i32
    %67 = tpu.dynamic_rotate %66 by %c17_i32_38 dim 1 : vector<8x256xf32>, i32 -> vector<8x256xf32>
    %68 = vector.broadcast %1 : vector<1x256xf32> to vector<8x256xf32>
    %69 = arith.mulf %67, %68 : vector<8x256xf32>
    %c16_i32_39 = arith.constant 16 : i32
    %70 = tpu.dynamic_rotate %66 by %c16_i32_39 dim 1 : vector<8x256xf32>, i32 -> vector<8x256xf32>
    %71 = vector.broadcast %3 : vector<1x256xf32> to vector<8x256xf32>
    %72 = arith.mulf %70, %71 : vector<8x256xf32>
    %c15_i32_40 = arith.constant 15 : i32
    %73 = tpu.dynamic_rotate %66 by %c15_i32_40 dim 1 : vector<8x256xf32>, i32 -> vector<8x256xf32>
    %74 = vector.broadcast %5 : vector<1x256xf32> to vector<8x256xf32>
    %75 = arith.mulf %73, %74 : vector<8x256xf32>
    %c1_i32_41 = arith.constant 1 : i32
    %76 = tpu.dynamic_rotate %66 by %c1_i32_41 dim 1 : vector<8x256xf32>, i32 -> vector<8x256xf32>
    %77 = vector.broadcast %7 : vector<1x256xf32> to vector<8x256xf32>
    %78 = arith.mulf %76, %77 : vector<8x256xf32>
    %c255_i32_42 = arith.constant 255 : i32
    %79 = tpu.dynamic_rotate %66 by %c255_i32_42 dim 1 : vector<8x256xf32>, i32 -> vector<8x256xf32>
    %80 = vector.broadcast %9 : vector<1x256xf32> to vector<8x256xf32>
    %81 = arith.mulf %79, %80 : vector<8x256xf32>
    %c241_i32_43 = arith.constant 241 : i32
    %82 = tpu.dynamic_rotate %66 by %c241_i32_43 dim 1 : vector<8x256xf32>, i32 -> vector<8x256xf32>
    %83 = vector.broadcast %11 : vector<1x256xf32> to vector<8x256xf32>
    %84 = arith.mulf %82, %83 : vector<8x256xf32>
    %c240_i32_44 = arith.constant 240 : i32
    %85 = tpu.dynamic_rotate %66 by %c240_i32_44 dim 1 : vector<8x256xf32>, i32 -> vector<8x256xf32>
    %86 = vector.broadcast %13 : vector<1x256xf32> to vector<8x256xf32>
    %87 = arith.mulf %85, %86 : vector<8x256xf32>
    %c239_i32_45 = arith.constant 239 : i32
    %88 = tpu.dynamic_rotate %66 by %c239_i32_45 dim 1 : vector<8x256xf32>, i32 -> vector<8x256xf32>
    %89 = vector.broadcast %15 : vector<1x256xf32> to vector<8x256xf32>
    %90 = arith.mulf %88, %89 : vector<8x256xf32>
    %91 = tpu.concatenate %69, %72, %75, %78, %66, %81, %84, %87, %90 in 0 : vector<8x256xf32>, vector<8x256xf32>, vector<8x256xf32>, vector<8x256xf32>, vector<8x256xf32>, vector<8x256xf32>, vector<8x256xf32>, vector<8x256xf32>, vector<8x256xf32> -> vector<72x256xf32>
    %c0_46 = arith.constant 0 : index
    %c0_47 = arith.constant 0 : index
    %92 = vector.load %arg5[%c0_46, %c0_47] : memref<8x72xf32, #tpu.memory_space<vmem>>, vector<8x72xf32>
    %cst_48 = arith.constant dense<0.000000e+00> : vector<8x256xf32>
    %93 = tpu.matmul %92, %91, %cst_48 {dimension_numbers = #tpu.dot_dimension_numbers<[1], [0], [0], [1], [0, 0, 1, 1], [], []>} : vector<8x72xf32>, vector<72x256xf32>, vector<8x256xf32> -> vector<8x256xf32>
    %c3_49 = arith.constant 3 : index
    %c0_50 = arith.constant 0 : index
    %c0_51 = arith.constant 0 : index
    %94 = vector.load %arg7[%c3_49, %c0_50, %c0_51] : memref<5x8x1xf32, #tpu.memory_space<vmem>>, vector<1x8x1xf32>
    %95 = vector.shape_cast %94 : vector<1x8x1xf32> to vector<8x1xf32>
    %96 = vector.broadcast %95 : vector<8x1xf32> to vector<8x256xf32>
    %97 = arith.addf %93, %96 : vector<8x256xf32>
    %cst_52 = arith.constant 0.000000e+00 : f32
    %98 = vector.broadcast %cst_52 : f32 to vector<8x256xf32>
    %99 = arith.maximumf %97, %98 : vector<8x256xf32>
    %100 = arith.addf %99, %57 : vector<8x256xf32>
    %c0_53 = arith.constant 0 : index
    %c0_54 = arith.constant 0 : index
    %101 = vector.load %arg6[%c0_53, %c0_54] : memref<8x8xf32, #tpu.memory_space<vmem>>, vector<8x8xf32>
    %cst_55 = arith.constant dense<0.000000e+00> : vector<8x256xf32>
    %102 = tpu.matmul %101, %100, %cst_55 {dimension_numbers = #tpu.dot_dimension_numbers<[1], [0], [0], [1], [0, 0, 1, 1], [], []>} : vector<8x8xf32>, vector<8x256xf32>, vector<8x256xf32> -> vector<8x256xf32>
    %c4 = arith.constant 4 : index
    %c0_56 = arith.constant 0 : index
    %c0_57 = arith.constant 0 : index
    %103 = vector.load %arg7[%c4, %c0_56, %c0_57] : memref<5x8x1xf32, #tpu.memory_space<vmem>>, vector<1x8x1xf32>
    %104 = vector.shape_cast %103 : vector<1x8x1xf32> to vector<8x1xf32>
    %105 = vector.broadcast %104 : vector<8x1xf32> to vector<8x256xf32>
    %106 = arith.addf %102, %105 : vector<8x256xf32>
    %cst_58 = arith.constant 0.000000e+00 : f32
    %107 = vector.broadcast %cst_58 : f32 to vector<8x256xf32>
    %108 = arith.maximumf %106, %107 : vector<8x256xf32>
    %c0_59 = arith.constant 0 : index
    %c0_60 = arith.constant 0 : index
    %109 = vector.load %arg9[%c0_59, %c0_60] : memref<8x256xf32, #tpu.memory_space<vmem>>, vector<8x256xf32>
    tpu.vector_store %arg9[%c0_59, %c0_60], %108 {strides = array<i32>} : memref<8x256xf32, #tpu.memory_space<vmem>>, vector<8x256xf32>,
    return
  }
  func.func @transform_0(%arg0: i32) -> (i32, i32) {
    %c0_i32 = arith.constant 0 : i32
    %c0_i32_0 = arith.constant 0 : i32
    return %c0_i32, %arg0 : i32, i32
  }
  func.func @transform_1(%arg0: i32) -> (i32, i32) {
    %c0_i32 = arith.constant 0 : i32
    %c0_i32_0 = arith.constant 0 : i32
    %c0_i32_1 = arith.constant 0 : i32
    return %c0_i32, %c0_i32_0 : i32, i32
  }
  func.func @transform_2(%arg0: i32) -> (i32, i32) {
    %c0_i32 = arith.constant 0 : i32
    %c0_i32_0 = arith.constant 0 : i32
    %c0_i32_1 = arith.constant 0 : i32
    return %c0_i32, %c0_i32_0 : i32, i32
  }
  func.func @transform_3(%arg0: i32) -> (i32, i32) {
    %c0_i32 = arith.constant 0 : i32
    %c0_i32_0 = arith.constant 0 : i32
    %c0_i32_1 = arith.constant 0 : i32
    return %c0_i32, %c0_i32_0 : i32, i32
  }
  func.func @transform_4(%arg0: i32) -> (i32, i32) {
    %c0_i32 = arith.constant 0 : i32
    %c0_i32_0 = arith.constant 0 : i32
    %c0_i32_1 = arith.constant 0 : i32
    return %c0_i32, %c0_i32_0 : i32, i32
  }
  func.func @transform_5(%arg0: i32) -> (i32, i32) {
    %c0_i32 = arith.constant 0 : i32
    %c0_i32_0 = arith.constant 0 : i32
    %c0_i32_1 = arith.constant 0 : i32
    return %c0_i32, %c0_i32_0 : i32, i32
  }
  func.func @transform_6(%arg0: i32) -> (i32, i32, i32) {
    %c0_i32 = arith.constant 0 : i32
    %c0_i32_0 = arith.constant 0 : i32
    %c0_i32_1 = arith.constant 0 : i32
    %c0_i32_2 = arith.constant 0 : i32
    return %c0_i32, %c0_i32_0, %c0_i32_1 : i32, i32, i32
  }
  func.func @transform_7(%arg0: i32) -> (i32, i32, i32) {
    %c0_i32 = arith.constant 0 : i32
    %c0_i32_0 = arith.constant 0 : i32
    %c0_i32_1 = arith.constant 0 : i32
    %c0_i32_2 = arith.constant 0 : i32
    return %c0_i32, %c0_i32_0, %c0_i32_1 : i32, i32, i32
  }
  func.func @transform_8(%arg0: i32) -> (i32, i32) {
    %c0_i32 = arith.constant 0 : i32
    %c0_i32_0 = arith.constant 0 : i32
    return %c0_i32, %arg0 : i32, i32
  }
}

</mosaic_0001>

<llo_original>
// kernel: tpu_custom_call.1
$region0: #{tpu_custom_call.1}
  #allocation0 [shape = 'u32[]', space=smem, size = 0x4, offset = 0x4, fixed_abs, tag = 'smem constant byte address 0x4 - core index']
  #allocation1 [shape = 'u32[72,128]{1,0:T(1,128)}', space=vmem, size = 0x9000, scoped, tag = 'internal scratch']
  %s0 = inlined_call_operand.vmem [shape: f32[4,512], index: 0, kind: input, shape index: {}]
  %s1 = inlined_call_operand.vmem [shape: f32[8,4], index: 1, kind: input, shape index: {}]
  %s2 = inlined_call_operand.vmem [shape: f32[8,72], index: 2, kind: input, shape index: {}]
  %s3 = inlined_call_operand.vmem [shape: f32[8,8], index: 3, kind: input, shape index: {}]
  %s4 = inlined_call_operand.hbm [shape: f32[8,72], index: 4, kind: input, shape index: {}]
  %s5 = inlined_call_operand.hbm [shape: f32[8,8], index: 5, kind: input, shape index: {}]
  %s6 = inlined_call_operand.vmem [shape: f32[5,8,1], index: 6, kind: input, shape index: {}]
  %s7 = inlined_call_operand.vmem [shape: f32[9,1,256], index: 7, kind: input, shape index: {}]
  %s8 = inlined_call_operand.hbm [shape: f32[8,512], index: 8, kind: output, shape index: {}]
  %s9 = sld [smem:[#allocation0]]
  $region73: #{tpu_custom_call.1} parent=0
    _
  %s11 = ssub.s32 1, %s9
  %s12 = scalar_select 0, %s11, %s9
  $region1: #{tpu_custom_call.1} parent=0
    #allocation2 [shape = 'u8[4096]{0}', space=vmem, size = 0x1000, scoped, tag = 'input window, operand 4, single buffered']
    #allocation3 [shape = 's32[2]{0}', space=sflag, size = 0x8, scoped, tag = 'scoped memory for tpu_custom_call.1']
    #allocation4 [shape = 's32[2]{0}', space=sflag, size = 0x8, scoped, tag = 'scoped memory for tpu_custom_call.1']
    #allocation5 [shape = 'u8[4096]{0}', space=vmem, size = 0x1000, scoped, tag = 'input window, operand 5, single buffered']
    #allocation6 [shape = 's32[1]{0}', space=sflag, size = 0x4, scoped, tag = 'scoped memory for tpu_custom_call.1']
    #allocation7 [shape = 'u8[16384]{0}', space=vmem, size = 0x4000, scoped, tag = 'output window, operand 0']
    %13 = vsyncpa [#allocation3], 0
    %14 = vsyncpa [#allocation6], 0
    %15 = vsyncpa [#allocation4], 0
    %s16 = scalar_lea.sflag [#allocation4], 1
    %17 = vsyncpa %s16, 0
    loop: start=0, step=1, limit=4
    $region2: #{tpu_custom_call.1} parent=1 // loop_pre_header
      _
    $region3: #{tpu_custom_call.1} parent=1 // loop_header
      %s19 = sphi 0, %s23
      %p20 = scmp.ge.s32.totalorder %s19, 4
      %s29 = sphi 0, %s31
      %s32 = sphi 0, %s29
      %s33 = sphi 0, %s32
      %s49 = sphi 0, %s33
      %s53 = sphi 0, %s53
      %s55 = sphi 0, %s53
      %s56 = sphi 0, %s55
      %s70 = sphi 0, %s56
      %s74 = sphi 0, %s74
      %s76 = sphi 0, %s74
      %s77 = sphi 0, %s76
      %s91 = sphi 0, %s77
      %s95 = sphi 0, %s95
      %s97 = sphi 0, %s95
      %s98 = sphi 0, %s97
      %s112 = sphi 0, %s98
      %s116 = sphi 0, %s116
      %s118 = sphi 0, %s116
      %s119 = sphi 0, %s118
      %s133 = sphi 0, %s119
      %s137 = sphi 0, %s137
      %s139 = sphi 0, %s137
      %s140 = sphi 0, %s139
      %s154 = sphi 0, %s140
      %s158 = sphi 0, %s158
      %s160 = sphi 0, %s158
      %s161 = sphi 0, %s160
      %s175 = sphi 0, %s161
      %s179 = sphi 0, %s179
      %s181 = sphi 0, %s179
      %s182 = sphi 0, %s181
      %s196 = sphi 0, %s182
      %s202 = sphi 0, %s204
      %s205 = sphi 0, %s202
      %s206 = sphi 0, %s205
      %s222 = sphi 0, %s206
    $region4: #{tpu_custom_call.1} parent=1 // loop_header_branch
      %22 = sbr.rel (%p20) target = $region8
    $region5: #{tpu_custom_call.1} parent=1 // loop_body
      %s24 = ssub.s32 %s19, 1
      %s25 = ssub.s32 %s19, 2
      %s26 = sadd.s32 %s19, 1
      %s27 = ssub.s32 %s19, %s26
      %p28 = scmp.eq.s32.totalorder %s27, 0
      %s30 = sadd.s32 %s29, 1
      %s31 = scalar_select %p28, %s29, %s30
      %p34 = pneg %p28
      %p35 = scmp.eq.s32.totalorder %s19, 1
      %p36 = por %p34, %p35
      %p37 = scmp.ne.s32.totalorder %s29, %s32
      %p38 = scmp.eq.s32.totalorder %s19, 0
      %p39 = por %p37, %p38
      %p40 = scmp.ne.s32.totalorder %s29, %s32
      %p41 = scmp.eq.s32.totalorder %s24, 1
      %p42 = por %p40, %p41
      %p43 = scmp.ne.s32.totalorder %s32, %s33
      %p44 = scmp.eq.s32.totalorder %s24, 0
      %p45 = por %p43, %p44
      %p46 = scmp.ne.s32.totalorder %s32, %s33
      %p47 = scmp.eq.s32.totalorder %s25, 1
      %p48 = por %p46, %p47
      %p50 = scmp.ne.s32.totalorder %s33, %s49
      %p51 = scmp.eq.s32.totalorder %s25, 0
      %p52 = por %p50, %p51
      %s54 = sadd.s32 %s53, 1
      %p57 = scmp.eq.s32.totalorder %s19, 1
      %p58 = scmp.ne.s32.totalorder %s53, %s55
      %p59 = scmp.eq.s32.totalorder %s19, 0
      %p60 = por %p58, %p59
      %p61 = scmp.ne.s32.totalorder %s53, %s55
      %p62 = scmp.eq.s32.totalorder %s24, 1
      %p63 = por %p61, %p62
      %p64 = scmp.ne.s32.totalorder %s55, %s56
      %p65 = scmp.eq.s32.totalorder %s24, 0
      %p66 = por %p64, %p65
      %p67 = scmp.ne.s32.totalorder %s55, %s56
      %p68 = scmp.eq.s32.totalorder %s25, 1
      %p69 = por %p67, %p68
      %p71 = scmp.ne.s32.totalorder %s56, %s70
      %p72 = scmp.eq.s32.totalorder %s25, 0
      %p73 = por %p71, %p72
      %s75 = sadd.s32 %s74, 1
      %p78 = scmp.eq.s32.totalorder %s19, 1
      %p79 = scmp.ne.s32.totalorder %s74, %s76
      %p80 = scmp.eq.s32.totalorder %s19, 0
      %p81 = por %p79, %p80
      %p82 = scmp.ne.s32.totalorder %s74, %s76
      %p83 = scmp.eq.s32.totalorder %s24, 1
      %p84 = por %p82, %p83
      %p85 = scmp.ne.s32.totalorder %s76, %s77
      %p86 = scmp.eq.s32.totalorder %s24, 0
      %p87 = por %p85, %p86
      %p88 = scmp.ne.s32.totalorder %s76, %s77
      %p89 = scmp.eq.s32.totalorder %s25, 1
      %p90 = por %p88, %p89
      %p92 = scmp.ne.s32.totalorder %s77, %s91
      %p93 = scmp.eq.s32.totalorder %s25, 0
      %p94 = por %p92, %p93
      %s96 = sadd.s32 %s95, 1
      %p99 = scmp.eq.s32.totalorder %s19, 1
      %p100 = scmp.ne.s32.totalorder %s95, %s97
      %p101 = scmp.eq.s32.totalorder %s19, 0
      %p102 = por %p100, %p101
      %p103 = scmp.ne.s32.totalorder %s95, %s97
      %p104 = scmp.eq.s32.totalorder %s24, 1
      %p105 = por %p103, %p104
      %p106 = scmp.ne.s32.totalorder %s97, %s98
      %p107 = scmp.eq.s32.totalorder %s24, 0
      %p108 = por %p106, %p107
      %p109 = scmp.ne.s32.totalorder %s97, %s98
      %p110 = scmp.eq.s32.totalorder %s25, 1
      %p111 = por %p109, %p110
      %p113 = scmp.ne.s32.totalorder %s98, %s112
      %p114 = scmp.eq.s32.totalorder %s25, 0
      %p115 = por %p113, %p114
      %s117 = sadd.s32 %s116, 1
      %p120 = scmp.eq.s32.totalorder %s19, 1
      %p121 = scmp.ne.s32.totalorder %s116, %s118
      %p122 = scmp.eq.s32.totalorder %s19, 0
      %p123 = por %p121, %p122
      %p124 = scmp.ne.s32.totalorder %s116, %s118
      %p125 = scmp.eq.s32.totalorder %s24, 1
      %p126 = por %p124, %p125
      %p127 = scmp.ne.s32.totalorder %s118, %s119
      %p128 = scmp.eq.s32.totalorder %s24, 0
      %p129 = por %p127, %p128
      %p130 = scmp.ne.s32.totalorder %s118, %s119
      %p131 = scmp.eq.s32.totalorder %s25, 1
      %p132 = por %p130, %p131
      %p134 = scmp.ne.s32.totalorder %s119, %s133
      %p135 = scmp.eq.s32.totalorder %s25, 0
      %p136 = por %p134, %p135
      %s138 = sadd.s32 %s137, 1
      %p141 = scmp.eq.s32.totalorder %s19, 1
      %p142 = scmp.ne.s32.totalorder %s137, %s139
      %p143 = scmp.eq.s32.totalorder %s19, 0
      %p144 = por %p142, %p143
      %p145 = scmp.ne.s32.totalorder %s137, %s139
      %p146 = scmp.eq.s32.totalorder %s24, 1
      %p147 = por %p145, %p146
      %p148 = scmp.ne.s32.totalorder %s139, %s140
      %p149 = scmp.eq.s32.totalorder %s24, 0
      %p150 = por %p148, %p149
      %p151 = scmp.ne.s32.totalorder %s139, %s140
      %p152 = scmp.eq.s32.totalorder %s25, 1
      %p153 = por %p151, %p152
      %p155 = scmp.ne.s32.totalorder %s140, %s154
      %p156 = scmp.eq.s32.totalorder %s25, 0
      %p157 = por %p155, %p156
      %s159 = sadd.s32 %s158, 1
      %p162 = scmp.eq.s32.totalorder %s19, 1
      %p163 = scmp.ne.s32.totalorder %s158, %s160
      %p164 = scmp.eq.s32.totalorder %s19, 0
      %p165 = por %p163, %p164
      %p166 = scmp.ne.s32.totalorder %s158, %s160
      %p167 = scmp.eq.s32.totalorder %s24, 1
      %p168 = por %p166, %p167
      %p169 = scmp.ne.s32.totalorder %s160, %s161
      %p170 = scmp.eq.s32.totalorder %s24, 0
      %p171 = por %p169, %p170
      %p172 = scmp.ne.s32.totalorder %s160, %s161
      %p173 = scmp.eq.s32.totalorder %s25, 1
      %p174 = por %p172, %p173
      %p176 = scmp.ne.s32.totalorder %s161, %s175
      %p177 = scmp.eq.s32.totalorder %s25, 0
      %p178 = por %p176, %p177
      %s180 = sadd.s32 %s179, 1
      %p183 = scmp.eq.s32.totalorder %s19, 1
      %p184 = scmp.ne.s32.totalorder %s179, %s181
      %p185 = scmp.eq.s32.totalorder %s19, 0
      %p186 = por %p184, %p185
      %p187 = scmp.ne.s32.totalorder %s179, %s181
      %p188 = scmp.eq.s32.totalorder %s24, 1
      %p189 = por %p187, %p188
      %p190 = scmp.ne.s32.totalorder %s181, %s182
      %p191 = scmp.eq.s32.totalorder %s24, 0
      %p192 = por %p190, %p191
      %p193 = scmp.ne.s32.totalorder %s181, %s182
      %p194 = scmp.eq.s32.totalorder %s25, 1
      %p195 = por %p193, %p194
      %p197 = scmp.ne.s32.totalorder %s182, %s196
      %p198 = scmp.eq.s32.totalorder %s25, 0
      %p199 = por %p197, %p198
      %s200 = ssub.s32 %s19, %s26
      %p201 = scmp.eq.s32.totalorder %s200, 0
      %s203 = sadd.s32 %s202, 1
      %s204 = scalar_select %p201, %s202, %s203
      %p207 = pneg %p201
      %p208 = scmp.eq.s32.totalorder %s19, 1
      %p209 = por %p207, %p208
      %p210 = scmp.ne.s32.totalorder %s202, %s205
      %p211 = scmp.eq.s32.totalorder %s19, 0
      %p212 = por %p210, %p211
      %p213 = scmp.ne.s32.totalorder %s202, %s205
      %p214 = scmp.eq.s32.totalorder %s24, 1
      %p215 = por %p213, %p214
      %p216 = scmp.ne.s32.totalorder %s205, %s206
      %p217 = scmp.eq.s32.totalorder %s24, 0
      %p218 = por %p216, %p217
      %p219 = scmp.ne.s32.totalorder %s205, %s206
      %p220 = scmp.eq.s32.totalorder %s25, 1
      %p221 = por %p219, %p220
      %p223 = scmp.ne.s32.totalorder %s206, %s222
      %p224 = scmp.eq.s32.totalorder %s25, 0
      %p225 = por %p223, %p224
      %p226 = scmp.le.s32.totalorder 1, %s19
      %p227 = scmp.lt.s32.totalorder %s19, 3
      %p228 = pnand %p226, %p227
      %p229 = pneg %p228
      // Predicated region
      $region9: #{tpu_custom_call.1} parent=5 // pred_check
        _
      $region10: #{tpu_custom_call.1} parent=5 // pred_check_branch
        %231 = sbr.rel (%p228) target = $region12
      $region11: #{tpu_custom_call.1} parent=5 // pred_region
        %s232 = ssub.s32 %s19, 1
        // Predicated region
        $region13: #{tpu_custom_call.1} parent=11 // pred_check
          %p233 = pneg %p66
        $region14: #{tpu_custom_call.1} parent=11 // pred_check_branch
          %235 = sbr.rel (%p233) target = $region16
        $region15: #{tpu_custom_call.1} parent=11 // pred_region
          _
        $region16: #{tpu_custom_call.1} parent=11 // pred_fallthru
          _
        // Predicated region
        $region17: #{tpu_custom_call.1} parent=11 // pred_check
          %p236 = pneg %p87
        $region18: #{tpu_custom_call.1} parent=11 // pred_check_branch
          %238 = sbr.rel (%p236) target = $region20
        $region19: #{tpu_custom_call.1} parent=11 // pred_region
          _
        $region20: #{tpu_custom_call.1} parent=11 // pred_fallthru
          _
        // Predicated region
        $region21: #{tpu_custom_call.1} parent=11 // pred_check
          %p239 = pneg %p108
        $region22: #{tpu_custom_call.1} parent=11 // pred_check_branch
          %241 = sbr.rel (%p239) target = $region24
        $region23: #{tpu_custom_call.1} parent=11 // pred_region
          _
        $region24: #{tpu_custom_call.1} parent=11 // pred_fallthru
          _
        // Predicated region
        $region25: #{tpu_custom_call.1} parent=11 // pred_check
          %p242 = pneg %p129
        $region26: #{tpu_custom_call.1} parent=11 // pred_check_branch
          %244 = sbr.rel (%p242) target = $region28
        $region27: #{tpu_custom_call.1} parent=11 // pred_region
          %246 = vsyncadd [#allocation3], 0
          %s248 = sshll.u32 %s4, 4
          %s249 = int_to_ptr.hbm [resolvable:$true] %s248
          %s250 = sshll.u32 [#allocation2], 4
          %s251 = int_to_ptr.vmem [resolvable:$true] %s250
          %253 = dma.hbm_to_vmem [thread:$0]  %s249, 128, %s251, [#allocation3]
        $region28: #{tpu_custom_call.1} parent=11 // pred_fallthru
          _
        // Predicated region
        $region29: #{tpu_custom_call.1} parent=11 // pred_check
          %p254 = pneg %p150
        $region30: #{tpu_custom_call.1} parent=11 // pred_check_branch
          %256 = sbr.rel (%p254) target = $region32
        $region31: #{tpu_custom_call.1} parent=11 // pred_region
          %258 = vsyncadd [#allocation6], 0
          %s260 = sshll.u32 %s5, 4
          %s261 = int_to_ptr.hbm [resolvable:$true] %s260
          %s262 = sshll.u32 [#allocation5], 4
          %s263 = int_to_ptr.vmem [resolvable:$true] %s262
          %265 = dma.hbm_to_vmem [thread:$0]  %s261, 128, %s263, [#allocation6]
        $region32: #{tpu_custom_call.1} parent=11 // pred_fallthru
          _
        // Predicated region
        $region33: #{tpu_custom_call.1} parent=11 // pred_check
          %p266 = pneg %p171
        $region34: #{tpu_custom_call.1} parent=11 // pred_check_branch
          %268 = sbr.rel (%p266) target = $region36
        $region35: #{tpu_custom_call.1} parent=11 // pred_region
          _
        $region36: #{tpu_custom_call.1} parent=11 // pred_fallthru
          _
        // Predicated region
        $region37: #{tpu_custom_call.1} parent=11 // pred_check
          %p269 = pneg %p192
        $region38: #{tpu_custom_call.1} parent=11 // pred_check_branch
          %271 = sbr.rel (%p269) target = $region40
        $region39: #{tpu_custom_call.1} parent=11 // pred_region
          _
        $region40: #{tpu_custom_call.1} parent=11 // pred_fallthru
          _
      $region12: #{tpu_custom_call.1} parent=5 // pred_fallthru
        _
      %p272 = scmp.lt.s32.totalorder %s19, 2
      // Predicated region
      $region41: #{tpu_custom_call.1} parent=5 // pred_check
        %p273 = pneg %p272
      $region42: #{tpu_custom_call.1} parent=5 // pred_check_branch
        %275 = sbr.rel (%p273) target = $region44
      $region43: #{tpu_custom_call.1} parent=5 // pred_region
        // Predicated region
        $region45: #{tpu_custom_call.1} parent=43 // pred_check
          %p276 = pneg %p39
        $region46: #{tpu_custom_call.1} parent=43 // pred_check_branch
          %278 = sbr.rel (%p276) target = $region48
        $region47: #{tpu_custom_call.1} parent=43 // pred_region
          %s279 = smul.u32 2, %s19
          %p280 = scmp.lt.s32.totalorder %s279, 3
          %s281 = scalar_select %p280, %s279, 3
          %s282 = smul.addr %s281, 4
          %s283 = scalar_lea.vmem %s0, %s282
          %s284 = smul.u32 2, %s19
        $region48: #{tpu_custom_call.1} parent=43 // pred_fallthru
          _
      $region44: #{tpu_custom_call.1} parent=5 // pred_fallthru
        _
      %p285 = scmp.le.s32.totalorder 1, %s19
      %p286 = scmp.lt.s32.totalorder %s19, 3
      %p287 = pnand %p285, %p286
      %p288 = pneg %p287
      // Predicated region
      $region49: #{tpu_custom_call.1} parent=5 // pred_check
        _
      $region50: #{tpu_custom_call.1} parent=5 // pred_check_branch
        %290 = sbr.rel (%p287) target = $region52
      $region51: #{tpu_custom_call.1} parent=5 // pred_region
        %s291 = ssub.s32 %s19, 1
        // Predicated region
        $region53: #{tpu_custom_call.1} parent=51 // pred_check
          %p292 = pneg %p129
        $region54: #{tpu_custom_call.1} parent=51 // pred_check_branch
          %294 = sbr.rel (%p292) target = $region56
        $region55: #{tpu_custom_call.1} parent=51 // pred_region
          %296 = dma.done [#allocation3], 128
        $region56: #{tpu_custom_call.1} parent=51 // pred_fallthru
          _
        // Predicated region
        $region57: #{tpu_custom_call.1} parent=51 // pred_check
          %p297 = pneg %p150
        $region58: #{tpu_custom_call.1} parent=51 // pred_check_branch
          %299 = sbr.rel (%p297) target = $region60
        $region59: #{tpu_custom_call.1} parent=51 // pred_region
          %301 = dma.done [#allocation6], 128
        $region60: #{tpu_custom_call.1} parent=51 // pred_fallthru
          _
        %s302 = smul.u32 2, %s24
        %p303 = scmp.lt.s32.totalorder %s302, 3
        %s304 = scalar_select %p303, %s302, 3
        %s305 = smul.addr %s304, 4
        %s306 = scalar_lea.vmem %s0, %s305
        %p307 = pneg %p45
        %p308 = pneg %p42
        %p309 = pneg %p66
        %p310 = pneg %p63
        %p311 = pneg %p87
        %p312 = pneg %p84
        %p313 = pneg %p108
        %p314 = pneg %p105
        %p315 = pneg %p129
        %p316 = pneg %p126
        %p317 = pneg %p150
        %p318 = pneg %p147
        %p319 = pneg %p171
        %p320 = pneg %p168
        %p321 = pneg %p192
        %p322 = pneg %p189
        %p323 = pneg %p218
        %p324 = pneg %p215
        %s325 = sand.u32 %s205, 1
        %s326 = scalar_lea.sflag [#allocation4], %s325
        %s327 = sand.u32 %s205, 1
        %s328 = smul.addr %s327, 16
        %s329 = scalar_lea.vmem [#allocation7], %s328
        %s330 = smul.u32 2, %s24
        %p331 = scmp.lt.s32.totalorder %s330, 3
        %s332 = scalar_select %p331, %s330, 3
        %s333 = smul.addr %s332, 4
        %s334 = scalar_lea.vmem %s0, %s333
        %s335 = smul.u32 2, %s24
        %s336 = smul.u32 2, %s24
        %v337 = vld [vmem:[%s7] sm:$0x3]
        %s338 = scalar_lea.vmem %s7, 2
        %v339 = vld [vmem:[%s338] sm:$0x3]
        %s340 = scalar_lea.vmem %s7, 4
        %v341 = vld [vmem:[%s340] sm:$0x3]
        %s342 = scalar_lea.vmem %s7, 6
        %v343 = vld [vmem:[%s342] sm:$0x3]
        %s344 = scalar_lea.vmem %s7, 10
        %v345 = vld [vmem:[%s344] sm:$0x3]
        %s346 = scalar_lea.vmem %s7, 12
        %v347 = vld [vmem:[%s346] sm:$0x3]
        %s348 = scalar_lea.vmem %s7, 14
        %v349 = vld [vmem:[%s348] sm:$0x3]
        %s350 = scalar_lea.vmem %s7, 16
        %v351 = vld [vmem:[%s350] sm:$0x3]
        %v352 = vld [vmem:[%s334] sm:$0xff]
        %v353 = vld [vmem:[%s1] sm:$0xff]
        %v354 = vld [vmem:[%s6] sm:$0xff]
        %356 = vset.pattern.permute.xlu0 0
        %357 = vperm.xlu0 %356, %v354
        %v358 = vpop.permute.xlu0 %357
        %361 = vst [vmem:[#allocation1] ss:$2 sm:$0xff] %v352
        %v362 = vld.sshfl [vmem:[#allocation1] sm:$0xff pattern:$0x75316420]
        %v363 = vld.sshfl [vmem:[#allocation1 + $0x8] sm:$0xff pattern:$0x75316420]
        %vm364 = vcmask 31744
        %v366 = vsel %vm364, %v353, 0
        %vm368 = vcmask 1043456
        %v369 = vsel %vm368, %v362, 0
        %v371 = vsel %vm368, %v363, 0
        %373 = vmatpush.msra.mxu0 0.0
        %374 = vmatpush.msra.mxu0 0.0
        %375 = vmatpush.msra.mxu0 0.0
        %376 = vmatpush.msra.mxu0 0.0
        %377 = vmatpush.msra.mxu0 0.0
        %378 = vmatpush.msra.mxu0 0.0
        %379 = vmatpush.msra.mxu0 0.0
        %380 = vmatpush.msra.mxu0 0.0
        %381 = vmatpush.msra.mxu0 0.0
        %382 = vmatpush.msra.mxu0 0.0
        %383 = vmatpush.msra.mxu0 0.0
        %384 = vmatpush.msra.mxu0 0.0
        %385 = vmatpush.msra.mxu0 0.0
        %386 = vmatpush.msra.mxu0 0.0
        %387 = vmatpush.msra.mxu0 0.0
        %388 = vmatpush.msra.mxu0 %v369
        %389 = vmatmul.f32.gmra.mxu0 %v366
        %v390 = vpop.f32.mrf.mxu0
        %v391 = vadd.f32 %v358, %v390
        %392 = vdwg.mxu0
        %393 = vmatpush.msra.mxu0 0.0
        %394 = vmatpush.msra.mxu0 0.0
        %395 = vmatpush.msra.mxu0 0.0
        %396 = vmatpush.msra.mxu0 0.0
        %397 = vmatpush.msra.mxu0 0.0
        %398 = vmatpush.msra.mxu0 0.0
        %399 = vmatpush.msra.mxu0 0.0
        %400 = vmatpush.msra.mxu0 0.0
        %401 = vmatpush.msra.mxu0 0.0
        %402 = vmatpush.msra.mxu0 0.0
        %403 = vmatpush.msra.mxu0 0.0
        %404 = vmatpush.msra.mxu0 0.0
        %405 = vmatpush.msra.mxu0 0.0
        %406 = vmatpush.msra.mxu0 0.0
        %407 = vmatpush.msra.mxu0 0.0
        %408 = vmatpush.msra.mxu0 %v371
        %409 = vmatmul.f32.gmra.mxu0 %v366
        %v410 = vpop.f32.mrf.mxu0
        %v411 = vadd.f32 %v358, %v410
        %412 = vdwg.mxu0
        %v413 = vmax.f32 %v391, 0.0
        %v414 = vmax.f32 %v411, 0.0
        %415 = vrot.lane.b32.xlu0 %v413, 17
        %v416 = vpop.permute.xlu0 %415
        %417 = vrot.lane.b32.xlu0 %v414, 17
        %v418 = vpop.permute.xlu0 %417
        %v419 = vlaneseq
        %v420 = vand.u32 %v419, 127
        %vm421 = vcmp.lt.s32.totalorder %v420, 17
        %v422 = vsel %vm421, %v416, %v418
        %v423 = vsel %vm421, %v418, %v416
        %v425 = vperm.slane %v337, 0
        %v426 = vperm.slane %v337, 1
        %v429 = vmul.f32 %v423, %v425
        %v430 = vmul.f32 %v422, %v426
        %431 = vrot.lane.b32.xlu0 %v413, 16
        %v432 = vpop.permute.xlu0 %431
        %433 = vrot.lane.b32.xlu0 %v414, 16
        %v434 = vpop.permute.xlu0 %433
        %vm435 = vcmp.lt.s32.totalorder %v420, 16
        %v436 = vsel %vm435, %v432, %v434
        %v437 = vsel %vm435, %v434, %v432
        %v439 = vperm.slane %v339, 0
        %v440 = vperm.slane %v339, 1
        %v443 = vmul.f32 %v437, %v439
        %v444 = vmul.f32 %v436, %v440
        %445 = vrot.lane.b32.xlu0 %v413, 15
        %v446 = vpop.permute.xlu0 %445
        %447 = vrot.lane.b32.xlu0 %v414, 15
        %v448 = vpop.permute.xlu0 %447
        %vm449 = vcmp.lt.s32.totalorder %v420, 15
        %v450 = vsel %vm449, %v446, %v448
        %v451 = vsel %vm449, %v448, %v446
        %v453 = vperm.slane %v341, 0
        %v454 = vperm.slane %v341, 1
        %v457 = vmul.f32 %v451, %v453
        %v458 = vmul.f32 %v450, %v454
        %459 = vrot.lane.b32.xlu0 %v413, 1
        %v460 = vpop.permute.xlu0 %459
        %461 = vrot.lane.b32.xlu0 %v414, 1
        %v462 = vpop.permute.xlu0 %461
        %vm463 = vcmp.lt.s32.totalorder %v420, 1
        %v464 = vsel %vm463, %v460, %v462
        %v465 = vsel %vm463, %v462, %v460
        %v467 = vperm.slane %v343, 0
        %v468 = vperm.slane %v343, 1
        %v471 = vmul.f32 %v465, %v467
        %v472 = vmul.f32 %v464, %v468
        %473 = vrot.lane.b32.xlu0 %v413, 127
        %v474 = vpop.permute.xlu0 %473
        %475 = vrot.lane.b32.xlu0 %v414, 127
        %v476 = vpop.permute.xlu0 %475
        %vm477 = vcmp.lt.s32.totalorder %v420, 127
        %v478 = vsel %vm477, %v474, %v476
        %v479 = vsel %vm477, %v476, %v474
        %v481 = vperm.slane %v345, 0
        %v482 = vperm.slane %v345, 1
        %v485 = vmul.f32 %v478, %v481
        %v486 = vmul.f32 %v479, %v482
        %487 = vrot.lane.b32.xlu0 %v413, 113
        %v488 = vpop.permute.xlu0 %487
        %489 = vrot.lane.b32.xlu0 %v414, 113
        %v490 = vpop.permute.xlu0 %489
        %vm491 = vcmp.lt.s32.totalorder %v420, 113
        %v492 = vsel %vm491, %v488, %v490
        %v493 = vsel %vm491, %v490, %v488
        %v495 = vperm.slane %v347, 0
        %v496 = vperm.slane %v347, 1
        %v499 = vmul.f32 %v492, %v495
        %v500 = vmul.f32 %v493, %v496
        %501 = vrot.lane.b32.xlu0 %v413, 112
        %v502 = vpop.permute.xlu0 %501
        %503 = vrot.lane.b32.xlu0 %v414, 112
        %v504 = vpop.permute.xlu0 %503
        %vm505 = vcmp.lt.s32.totalorder %v420, 112
        %v506 = vsel %vm505, %v502, %v504
        %v507 = vsel %vm505, %v504, %v502
        %v509 = vperm.slane %v349, 0
        %v510 = vperm.slane %v349, 1
        %v513 = vmul.f32 %v506, %v509
        %v514 = vmul.f32 %v507, %v510
        %515 = vrot.lane.b32.xlu0 %v413, 111
        %v516 = vpop.permute.xlu0 %515
        %517 = vrot.lane.b32.xlu0 %v414, 111
        %v518 = vpop.permute.xlu0 %517
        %vm519 = vcmp.lt.s32.totalorder %v420, 111
        %v520 = vsel %vm519, %v516, %v518
        %v521 = vsel %vm519, %v518, %v516
        %v523 = vperm.slane %v351, 0
        %v524 = vperm.slane %v351, 1
        %v527 = vmul.f32 %v520, %v523
        %v528 = vmul.f32 %v521, %v524
        %v529 = vld [vmem:[%s2] sm:$0xff]
        %s530 = scalar_lea.vmem %s6, 8
        %v531 = vld [vmem:[%s530] sm:$0xff]
        %533 = vset.pattern.permute.xlu0 0
        %534 = vperm.xlu0 %533, %v531
        %v535 = vpop.permute.xlu0 %534
        %vm537 = vcmask 588800
        %v539 = vsel %vm537, %v529, 0
        %541 = vmatpush.msra.mxu0 0.0
        %542 = vmatpush.msra.mxu0 0.0
        %543 = vmatpush.msra.mxu0 0.0
        %544 = vmatpush.msra.mxu0 0.0
        %545 = vmatpush.msra.mxu0 0.0
        %546 = vmatpush.msra.mxu0 0.0
        %547 = vmatpush.msra.mxu0 0.0
        %548 = vmatpush.msra.mxu0 %v527
        %549 = vmatpush.msra.mxu0 %v513
        %550 = vmatpush.msra.mxu0 %v499
        %551 = vmatpush.msra.mxu0 %v485
        %552 = vmatpush.msra.mxu0 %v413
        %553 = vmatpush.msra.mxu0 %v471
        %554 = vmatpush.msra.mxu0 %v457
        %555 = vmatpush.msra.mxu0 %v443
        %556 = vmatpush.msra.mxu0 %v429
        %557 = vmatmul.f32.gmra.mxu0 %v539
        %v558 = vpop.f32.mrf.mxu0
        %v559 = vadd.f32 %v535, %v558
        %560 = vdwg.mxu0
        %561 = vmatpush.msra.mxu0 0.0
        %562 = vmatpush.msra.mxu0 0.0
        %563 = vmatpush.msra.mxu0 0.0
        %564 = vmatpush.msra.mxu0 0.0
        %565 = vmatpush.msra.mxu0 0.0
        %566 = vmatpush.msra.mxu0 0.0
        %567 = vmatpush.msra.mxu0 0.0
        %568 = vmatpush.msra.mxu0 %v528
        %569 = vmatpush.msra.mxu0 %v514
        %570 = vmatpush.msra.mxu0 %v500
        %571 = vmatpush.msra.mxu0 %v486
        %572 = vmatpush.msra.mxu0 %v414
        %573 = vmatpush.msra.mxu0 %v472
        %574 = vmatpush.msra.mxu0 %v458
        %575 = vmatpush.msra.mxu0 %v444
        %576 = vmatpush.msra.mxu0 %v430
        %577 = vmatmul.f32.gmra.mxu0 %v539
        %v578 = vpop.f32.mrf.mxu0
        %v579 = vadd.f32 %v535, %v578
        %580 = vdwg.mxu0
        %v581 = vmax.f32 %v559, 0.0
        %v582 = vmax.f32 %v579, 0.0
        %v583 = vld [vmem:[%s3] sm:$0xff]
        %s584 = scalar_lea.vmem %s6, 16
        %v585 = vld [vmem:[%s584] sm:$0xff]
        %587 = vset.pattern.permute.xlu0 0
        %588 = vperm.xlu0 %587, %v585
        %v589 = vpop.permute.xlu0 %588
        %vm591 = vcmask 64512
        %v593 = vsel %vm591, %v583, 0
        %595 = vmatpush.msra.mxu0 0.0
        %596 = vmatpush.msra.mxu0 0.0
        %597 = vmatpush.msra.mxu0 0.0
        %598 = vmatpush.msra.mxu0 0.0
        %599 = vmatpush.msra.mxu0 0.0
        %600 = vmatpush.msra.mxu0 0.0
        %601 = vmatpush.msra.mxu0 0.0
        %602 = vmatpush.msra.mxu0 0.0
        %603 = vmatpush.msra.mxu0 0.0
        %604 = vmatpush.msra.mxu0 0.0
        %605 = vmatpush.msra.mxu0 0.0
        %606 = vmatpush.msra.mxu0 0.0
        %607 = vmatpush.msra.mxu0 0.0
        %608 = vmatpush.msra.mxu0 0.0
        %609 = vmatpush.msra.mxu0 0.0
        %610 = vmatpush.msra.mxu0 %v581
        %611 = vmatmul.f32.gmra.mxu0 %v593
        %v612 = vpop.f32.mrf.mxu0
        %v613 = vadd.f32 %v589, %v612
        %614 = vdwg.mxu0
        %615 = vmatpush.msra.mxu0 0.0
        %616 = vmatpush.msra.mxu0 0.0
        %617 = vmatpush.msra.mxu0 0.0
        %618 = vmatpush.msra.mxu0 0.0
        %619 = vmatpush.msra.mxu0 0.0
        %620 = vmatpush.msra.mxu0 0.0
        %621 = vmatpush.msra.mxu0 0.0
        %622 = vmatpush.msra.mxu0 0.0
        %623 = vmatpush.msra.mxu0 0.0
        %624 = vmatpush.msra.mxu0 0.0
        %625 = vmatpush.msra.mxu0 0.0
        %626 = vmatpush.msra.mxu0 0.0
        %627 = vmatpush.msra.mxu0 0.0
        %628 = vmatpush.msra.mxu0 0.0
        %629 = vmatpush.msra.mxu0 0.0
        %630 = vmatpush.msra.mxu0 %v582
        %631 = vmatmul.f32.gmra.mxu0 %v593
        %v632 = vpop.f32.mrf.mxu0
        %v633 = vadd.f32 %v589, %v632
        %634 = vdwg.mxu0
        %v635 = vmax.f32 %v613, 0.0
        %v636 = vmax.f32 %v633, 0.0
        %v637 = vadd.f32 %v635, %v413
        %v638 = vadd.f32 %v636, %v414
        %639 = vrot.lane.b32.xlu0 %v637, 17
        %v640 = vpop.permute.xlu0 %639
        %641 = vrot.lane.b32.xlu0 %v638, 17
        %v642 = vpop.permute.xlu0 %641
        %v643 = vsel %vm421, %v640, %v642
        %v644 = vsel %vm421, %v642, %v640
        %v645 = vmul.f32 %v644, %v425
        %v646 = vmul.f32 %v643, %v426
        %647 = vrot.lane.b32.xlu0 %v637, 16
        %v648 = vpop.permute.xlu0 %647
        %649 = vrot.lane.b32.xlu0 %v638, 16
        %v650 = vpop.permute.xlu0 %649
        %v651 = vsel %vm435, %v648, %v650
        %v652 = vsel %vm435, %v650, %v648
        %v653 = vmul.f32 %v652, %v439
        %v654 = vmul.f32 %v651, %v440
        %655 = vrot.lane.b32.xlu0 %v637, 15
        %v656 = vpop.permute.xlu0 %655
        %657 = vrot.lane.b32.xlu0 %v638, 15
        %v658 = vpop.permute.xlu0 %657
        %v659 = vsel %vm449, %v656, %v658
        %v660 = vsel %vm449, %v658, %v656
        %v661 = vmul.f32 %v660, %v453
        %v662 = vmul.f32 %v659, %v454
        %663 = vrot.lane.b32.xlu0 %v637, 1
        %v664 = vpop.permute.xlu0 %663
        %665 = vrot.lane.b32.xlu0 %v638, 1
        %v666 = vpop.permute.xlu0 %665
        %v667 = vsel %vm463, %v664, %v666
        %v668 = vsel %vm463, %v666, %v664
        %v669 = vmul.f32 %v668, %v467
        %v670 = vmul.f32 %v667, %v468
        %671 = vrot.lane.b32.xlu0 %v637, 127
        %v672 = vpop.permute.xlu0 %671
        %673 = vrot.lane.b32.xlu0 %v638, 127
        %v674 = vpop.permute.xlu0 %673
        %v675 = vsel %vm477, %v672, %v674
        %v676 = vsel %vm477, %v674, %v672
        %v677 = vmul.f32 %v675, %v481
        %v678 = vmul.f32 %v676, %v482
        %679 = vrot.lane.b32.xlu0 %v637, 113
        %v680 = vpop.permute.xlu0 %679
        %681 = vrot.lane.b32.xlu0 %v638, 113
        %v682 = vpop.permute.xlu0 %681
        %v683 = vsel %vm491, %v680, %v682
        %v684 = vsel %vm491, %v682, %v680
        %v685 = vmul.f32 %v683, %v495
        %v686 = vmul.f32 %v684, %v496
        %687 = vrot.lane.b32.xlu0 %v637, 112
        %v688 = vpop.permute.xlu0 %687
        %689 = vrot.lane.b32.xlu0 %v638, 112
        %v690 = vpop.permute.xlu0 %689
        %v691 = vsel %vm505, %v688, %v690
        %v692 = vsel %vm505, %v690, %v688
        %v693 = vmul.f32 %v691, %v509
        %v694 = vmul.f32 %v692, %v510
        %695 = vrot.lane.b32.xlu0 %v637, 111
        %v696 = vpop.permute.xlu0 %695
        %697 = vrot.lane.b32.xlu0 %v638, 111
        %v698 = vpop.permute.xlu0 %697
        %v699 = vsel %vm519, %v696, %v698
        %v700 = vsel %vm519, %v698, %v696
        %v701 = vmul.f32 %v699, %v523
        %v702 = vmul.f32 %v700, %v524
        %v703 = vld [vmem:[#allocation2] sm:$0xff]
        %s704 = scalar_lea.vmem %s6, 24
        %v705 = vld [vmem:[%s704] sm:$0xff]
        %707 = vset.pattern.permute.xlu0 0
        %708 = vperm.xlu0 %707, %v705
        %v709 = vpop.permute.xlu0 %708
        %v712 = vsel %vm537, %v703, 0
        %714 = vmatpush.msra.mxu0 0.0
        %715 = vmatpush.msra.mxu0 0.0
        %716 = vmatpush.msra.mxu0 0.0
        %717 = vmatpush.msra.mxu0 0.0
        %718 = vmatpush.msra.mxu0 0.0
        %719 = vmatpush.msra.mxu0 0.0
        %720 = vmatpush.msra.mxu0 0.0
        %721 = vmatpush.msra.mxu0 %v701
        %722 = vmatpush.msra.mxu0 %v693
        %723 = vmatpush.msra.mxu0 %v685
        %724 = vmatpush.msra.mxu0 %v677
        %725 = vmatpush.msra.mxu0 %v637
        %726 = vmatpush.msra.mxu0 %v669
        %727 = vmatpush.msra.mxu0 %v661
        %728 = vmatpush.msra.mxu0 %v653
        %729 = vmatpush.msra.mxu0 %v645
        %730 = vmatmul.f32.gmra.mxu0 %v712
        %v731 = vpop.f32.mrf.mxu0
        %v732 = vadd.f32 %v709, %v731
        %733 = vdwg.mxu0
        %734 = vmatpush.msra.mxu0 0.0
        %735 = vmatpush.msra.mxu0 0.0
        %736 = vmatpush.msra.mxu0 0.0
        %737 = vmatpush.msra.mxu0 0.0
        %738 = vmatpush.msra.mxu0 0.0
        %739 = vmatpush.msra.mxu0 0.0
        %740 = vmatpush.msra.mxu0 0.0
        %741 = vmatpush.msra.mxu0 %v702
        %742 = vmatpush.msra.mxu0 %v694
        %743 = vmatpush.msra.mxu0 %v686
        %744 = vmatpush.msra.mxu0 %v678
        %745 = vmatpush.msra.mxu0 %v638
        %746 = vmatpush.msra.mxu0 %v670
        %747 = vmatpush.msra.mxu0 %v662
        %748 = vmatpush.msra.mxu0 %v654
        %749 = vmatpush.msra.mxu0 %v646
        %750 = vmatmul.f32.gmra.mxu0 %v712
        %v751 = vpop.f32.mrf.mxu0
        %v752 = vadd.f32 %v709, %v751
        %753 = vdwg.mxu0
        %v754 = vmax.f32 %v732, 0.0
        %v755 = vmax.f32 %v752, 0.0
        %v756 = vadd.f32 %v754, %v581
        %v757 = vadd.f32 %v755, %v582
        %v758 = vld [vmem:[#allocation5] sm:$0xff]
        %s759 = scalar_lea.vmem %s6, 32
        %v760 = vld [vmem:[%s759] sm:$0xff]
        %762 = vset.pattern.permute.xlu0 0
        %763 = vperm.xlu0 %762, %v760
        %v764 = vpop.permute.xlu0 %763
        %v767 = vsel %vm591, %v758, 0
        %769 = vmatpush.msra.mxu0 0.0
        %770 = vmatpush.msra.mxu0 0.0
        %771 = vmatpush.msra.mxu0 0.0
        %772 = vmatpush.msra.mxu0 0.0
        %773 = vmatpush.msra.mxu0 0.0
        %774 = vmatpush.msra.mxu0 0.0
        %775 = vmatpush.msra.mxu0 0.0
        %776 = vmatpush.msra.mxu0 0.0
        %777 = vmatpush.msra.mxu0 0.0
        %778 = vmatpush.msra.mxu0 0.0
        %779 = vmatpush.msra.mxu0 0.0
        %780 = vmatpush.msra.mxu0 0.0
        %781 = vmatpush.msra.mxu0 0.0
        %782 = vmatpush.msra.mxu0 0.0
        %783 = vmatpush.msra.mxu0 0.0
        %784 = vmatpush.msra.mxu0 %v756
        %785 = vmatmul.f32.gmra.mxu0 %v767
        %v786 = vpop.f32.mrf.mxu0
        %v787 = vadd.f32 %v764, %v786
        %788 = vdwg.mxu0
        %789 = vmatpush.msra.mxu0 0.0
        %790 = vmatpush.msra.mxu0 0.0
        %791 = vmatpush.msra.mxu0 0.0
        %792 = vmatpush.msra.mxu0 0.0
        %793 = vmatpush.msra.mxu0 0.0
        %794 = vmatpush.msra.mxu0 0.0
        %795 = vmatpush.msra.mxu0 0.0
        %796 = vmatpush.msra.mxu0 0.0
        %797 = vmatpush.msra.mxu0 0.0
        %798 = vmatpush.msra.mxu0 0.0
        %799 = vmatpush.msra.mxu0 0.0
        %800 = vmatpush.msra.mxu0 0.0
        %801 = vmatpush.msra.mxu0 0.0
        %802 = vmatpush.msra.mxu0 0.0
        %803 = vmatpush.msra.mxu0 0.0
        %804 = vmatpush.msra.mxu0 %v757
        %805 = vmatmul.f32.gmra.mxu0 %v767
        %v806 = vpop.f32.mrf.mxu0
        %v807 = vadd.f32 %v764, %v806
        %808 = vdwg.mxu0
        %v809 = vmax.f32 %v787, 0.0
        %v810 = vmax.f32 %v807, 0.0
        %811 = vst [vmem:[%s329] sm:$0xff] %v809
        %812 = vst [vmem:[%s329 + $0x8] sm:$0xff] %v810
        %s813 = sand.u32 %s205, 1
        %s814 = scalar_lea.sflag [#allocation4], %s813
        %s815 = sand.u32 %s205, 1
        %s816 = smul.addr %s815, 16
        %s817 = scalar_lea.vmem [#allocation7], %s816
        // Predicated region
        $region61: #{tpu_custom_call.1} parent=51 // pred_check
          %p818 = pneg %p215
        $region62: #{tpu_custom_call.1} parent=51 // pred_check_branch
          %820 = sbr.rel (%p818) target = $region64
        $region63: #{tpu_custom_call.1} parent=51 // pred_region
          %s821 = smul.u32 2, %s24
          %823 = vsyncadd %s814, 0
          %s824 = smul.addr %s821, 8
          %s825 = scalar_lea.hbm %s8, %s824
          %s827 = sshll.u32 %s817, 4
          %s828 = int_to_ptr.vmem [resolvable:$true] %s827
          %s829 = sshll.u32 %s825, 4
          %s830 = int_to_ptr.hbm [resolvable:$true] %s829
          %832 = dma.vmem_to_hbm [thread:$0]  %s828, 256, %s830, %s814
        $region64: #{tpu_custom_call.1} parent=51 // pred_fallthru
          _
      $region52: #{tpu_custom_call.1} parent=5 // pred_fallthru
        _
      %p833 = scmp.le.s32.totalorder 2, %s19
      // Predicated region
      $region65: #{tpu_custom_call.1} parent=5 // pred_check
        %p834 = pneg %p833
      $region66: #{tpu_custom_call.1} parent=5 // pred_check_branch
        %836 = sbr.rel (%p834) target = $region68
      $region67: #{tpu_custom_call.1} parent=5 // pred_region
        %s837 = ssub.s32 %s19, 2
        // Predicated region
        $region69: #{tpu_custom_call.1} parent=67 // pred_check
          %p838 = pneg %p221
        $region70: #{tpu_custom_call.1} parent=67 // pred_check_branch
          %840 = sbr.rel (%p838) target = $region72
        $region71: #{tpu_custom_call.1} parent=67 // pred_region
          %s841 = sand.u32 %s206, 1
          %s842 = scalar_lea.sflag [#allocation4], %s841
          %s843 = sand.u32 %s206, 1
          %s844 = smul.addr %s843, 16
          %s845 = scalar_lea.vmem [#allocation7], %s844
          %847 = dma.done %s842, 256
        $region72: #{tpu_custom_call.1} parent=67 // pred_fallthru
          _
      $region68: #{tpu_custom_call.1} parent=5 // pred_fallthru
        _
    $region6: #{tpu_custom_call.1} parent=1 // loop_footer
      %s23 = sadd.s32 1, %s19
    $region7: #{tpu_custom_call.1} parent=1 // loop_footer_branch
      %18 = sbr.rel target = $region3
    $region8: #{tpu_custom_call.1} parent=1 // loop_exit
      _
    %848 = vsyncpa [#allocation3], 1
    %s849 = scalar_lea.sflag [#allocation3], 1
    %850 = vsyncpa %s849, 1
    %851 = vsyncpa [#allocation6], 1
    %852 = vsyncpa [#allocation4], 1
    %s853 = scalar_lea.sflag [#allocation4], 1
    %854 = vsyncpa %s853, 1

// kernel: tpu_custom_call.1
$region0: #{tpu_custom_call.1}
  #allocation0 [shape = 'u32[]', space=smem, size = 0x4, offset = 0x4, fixed_abs, tag = 'smem constant byte address 0x4 - core index']
  #allocation1 [shape = 'u32[72,128]{1,0:T(1,128)}', space=vmem, size = 0x9000, scoped, tag = 'internal scratch']
  %s0 = inlined_call_operand.vmem [shape: f32[4,512], index: 0, kind: input, shape index: {}]
  %s1 = inlined_call_operand.vmem [shape: f32[8,4], index: 1, kind: input, shape index: {}]
  %s2 = inlined_call_operand.vmem [shape: f32[8,72], index: 2, kind: input, shape index: {}]
  %s3 = inlined_call_operand.vmem [shape: f32[8,8], index: 3, kind: input, shape index: {}]
  %s4 = inlined_call_operand.hbm [shape: f32[8,72], index: 4, kind: input, shape index: {}]
  %s5 = inlined_call_operand.hbm [shape: f32[8,8], index: 5, kind: input, shape index: {}]
  %s6 = inlined_call_operand.vmem [shape: f32[5,8,1], index: 6, kind: input, shape index: {}]
  %s7 = inlined_call_operand.vmem [shape: f32[9,1,256], index: 7, kind: input, shape index: {}]
  %s8 = inlined_call_operand.hbm [shape: f32[8,512], index: 8, kind: output, shape index: {}]
  %s9 = sld [smem:[#allocation0]]
  $region73: #{tpu_custom_call.1} parent=0
    _
  %s11 = ssub.s32 1, %s9
  %s12 = scalar_select 0, %s11, %s9
  $region1: #{tpu_custom_call.1} parent=0
    #allocation2 [shape = 'u8[4096]{0}', space=vmem, size = 0x1000, scoped, tag = 'input window, operand 4, single buffered']
    #allocation3 [shape = 's32[2]{0}', space=sflag, size = 0x8, scoped, tag = 'scoped memory for tpu_custom_call.1']
    #allocation4 [shape = 's32[2]{0}', space=sflag, size = 0x8, scoped, tag = 'scoped memory for tpu_custom_call.1']
    #allocation5 [shape = 'u8[4096]{0}', space=vmem, size = 0x1000, scoped, tag = 'input window, operand 5, single buffered']
    #allocation6 [shape = 's32[1]{0}', space=sflag, size = 0x4, scoped, tag = 'scoped memory for tpu_custom_call.1']
    #allocation7 [shape = 'u8[16384]{0}', space=vmem, size = 0x4000, scoped, tag = 'output window, operand 0']
    %13 = vsyncpa [#allocation3], 0
    %14 = vsyncpa [#allocation6], 0
    %15 = vsyncpa [#allocation4], 0
    %s16 = scalar_lea.sflag [#allocation4], 1
    %17 = vsyncpa %s16, 0
    loop: start=0, step=1, limit=4
    $region2: #{tpu_custom_call.1} parent=1 // loop_pre_header
      _
    $region3: #{tpu_custom_call.1} parent=1 // loop_header
      %s19 = sphi 0, %s23
      %p20 = scmp.ge.s32.totalorder %s19, 4
      %s29 = sphi 0, %s31
      %s32 = sphi 0, %s29
      %s33 = sphi 0, %s32
      %s49 = sphi 0, %s33
      %s53 = sphi 0, %s53
      %s55 = sphi 0, %s53
      %s56 = sphi 0, %s55
      %s70 = sphi 0, %s56
      %s74 = sphi 0, %s74
      %s76 = sphi 0, %s74
      %s77 = sphi 0, %s76
      %s91 = sphi 0, %s77
      %s95 = sphi 0, %s95
      %s97 = sphi 0, %s95
      %s98 = sphi 0, %s97
      %s112 = sphi 0, %s98
      %s116 = sphi 0, %s116
      %s118 = sphi 0, %s116
      %s119 = sphi 0, %s118
      %s133 = sphi 0, %s119
      %s137 = sphi 0, %s137
      %s139 = sphi 0, %s137
      %s140 = sphi 0, %s139
      %s154 = sphi 0, %s140
      %s158 = sphi 0, %s158
      %s160 = sphi 0, %s158
      %s161 = sphi 0, %s160
      %s175 = sphi 0, %s161
      %s179 = sphi 0, %s179
      %s181 = sphi 0, %s179
      %s182 = sphi 0, %s181
      %s196 = sphi 0, %s182
      %s202 = sphi 0, %s204
      %s205 = sphi 0, %s202
      %s206 = sphi 0, %s205
      %s222 = sphi 0, %s206
    $region4: #{tpu_custom_call.1} parent=1 // loop_header_branch
      %22 = sbr.rel (%p20) target = $region8
    $region5: #{tpu_custom_call.1} parent=1 // loop_body
      %s24 = ssub.s32 %s19, 1
      %s25 = ssub.s32 %s19, 2
      %s26 = sadd.s32 %s19, 1
      %s27 = ssub.s32 %s19, %s26
      %p28 = scmp.eq.s32.totalorder %s27, 0
      %s30 = sadd.s32 %s29, 1
      %s31 = scalar_select %p28, %s29, %s30
      %p34 = pneg %p28
      %p35 = scmp.eq.s32.totalorder %s19, 1
      %p36 = por %p34, %p35
      %p37 = scmp.ne.s32.totalorder %s29, %s32
      %p38 = scmp.eq.s32.totalorder %s19, 0
      %p39 = por %p37, %p38
      %p40 = scmp.ne.s32.totalorder %s29, %s32
      %p41 = scmp.eq.s32.totalorder %s24, 1
      %p42 = por %p40, %p41
      %p43 = scmp.ne.s32.totalorder %s32, %s33
      %p44 = scmp.eq.s32.totalorder %s24, 0
      %p45 = por %p43, %p44
      %p46 = scmp.ne.s32.totalorder %s32, %s33
      %p47 = scmp.eq.s32.totalorder %s25, 1
      %p48 = por %p46, %p47
      %p50 = scmp.ne.s32.totalorder %s33, %s49
      %p51 = scmp.eq.s32.totalorder %s25, 0
      %p52 = por %p50, %p51
      %s54 = sadd.s32 %s53, 1
      %p57 = scmp.eq.s32.totalorder %s19, 1
      %p58 = scmp.ne.s32.totalorder %s53, %s55
      %p59 = scmp.eq.s32.totalorder %s19, 0
      %p60 = por %p58, %p59
      %p61 = scmp.ne.s32.totalorder %s53, %s55
      %p62 = scmp.eq.s32.totalorder %s24, 1
      %p63 = por %p61, %p62
      %p64 = scmp.ne.s32.totalorder %s55, %s56
      %p65 = scmp.eq.s32.totalorder %s24, 0
      %p66 = por %p64, %p65
      %p67 = scmp.ne.s32.totalorder %s55, %s56
      %p68 = scmp.eq.s32.totalorder %s25, 1
      %p69 = por %p67, %p68
      %p71 = scmp.ne.s32.totalorder %s56, %s70
      %p72 = scmp.eq.s32.totalorder %s25, 0
      %p73 = por %p71, %p72
      %s75 = sadd.s32 %s74, 1
      %p78 = scmp.eq.s32.totalorder %s19, 1
      %p79 = scmp.ne.s32.totalorder %s74, %s76
      %p80 = scmp.eq.s32.totalorder %s19, 0
      %p81 = por %p79, %p80
      %p82 = scmp.ne.s32.totalorder %s74, %s76
      %p83 = scmp.eq.s32.totalorder %s24, 1
      %p84 = por %p82, %p83
      %p85 = scmp.ne.s32.totalorder %s76, %s77
      %p86 = scmp.eq.s32.totalorder %s24, 0
      %p87 = por %p85, %p86
      %p88 = scmp.ne.s32.totalorder %s76, %s77
      %p89 = scmp.eq.s32.totalorder %s25, 1
      %p90 = por %p88, %p89
      %p92 = scmp.ne.s32.totalorder %s77, %s91
      %p93 = scmp.eq.s32.totalorder %s25, 0
      %p94 = por %p92, %p93
      %s96 = sadd.s32 %s95, 1
      %p99 = scmp.eq.s32.totalorder %s19, 1
      %p100 = scmp.ne.s32.totalorder %s95, %s97
      %p101 = scmp.eq.s32.totalorder %s19, 0
      %p102 = por %p100, %p101
      %p103 = scmp.ne.s32.totalorder %s95, %s97
      %p104 = scmp.eq.s32.totalorder %s24, 1
      %p105 = por %p103, %p104
      %p106 = scmp.ne.s32.totalorder %s97, %s98
      %p107 = scmp.eq.s32.totalorder %s24, 0
      %p108 = por %p106, %p107
      %p109 = scmp.ne.s32.totalorder %s97, %s98
      %p110 = scmp.eq.s32.totalorder %s25, 1
      %p111 = por %p109, %p110
      %p113 = scmp.ne.s32.totalorder %s98, %s112
      %p114 = scmp.eq.s32.totalorder %s25, 0
      %p115 = por %p113, %p114
      %s117 = sadd.s32 %s116, 1
      %p120 = scmp.eq.s32.totalorder %s19, 1
      %p121 = scmp.ne.s32.totalorder %s116, %s118
      %p122 = scmp.eq.s32.totalorder %s19, 0
      %p123 = por %p121, %p122
      %p124 = scmp.ne.s32.totalorder %s116, %s118
      %p125 = scmp.eq.s32.totalorder %s24, 1
      %p126 = por %p124, %p125
      %p127 = scmp.ne.s32.totalorder %s118, %s119
      %p128 = scmp.eq.s32.totalorder %s24, 0
      %p129 = por %p127, %p128
      %p130 = scmp.ne.s32.totalorder %s118, %s119
      %p131 = scmp.eq.s32.totalorder %s25, 1
      %p132 = por %p130, %p131
      %p134 = scmp.ne.s32.totalorder %s119, %s133
      %p135 = scmp.eq.s32.totalorder %s25, 0
      %p136 = por %p134, %p135
      %s138 = sadd.s32 %s137, 1
      %p141 = scmp.eq.s32.totalorder %s19, 1
      %p142 = scmp.ne.s32.totalorder %s137, %s139
      %p143 = scmp.eq.s32.totalorder %s19, 0
      %p144 = por %p142, %p143
      %p145 = scmp.ne.s32.totalorder %s137, %s139
      %p146 = scmp.eq.s32.totalorder %s24, 1
      %p147 = por %p145, %p146
      %p148 = scmp.ne.s32.totalorder %s139, %s140
      %p149 = scmp.eq.s32.totalorder %s24, 0
      %p150 = por %p148, %p149
      %p151 = scmp.ne.s32.totalorder %s139, %s140
      %p152 = scmp.eq.s32.totalorder %s25, 1
      %p153 = por %p151, %p152
      %p155 = scmp.ne.s32.totalorder %s140, %s154
      %p156 = scmp.eq.s32.totalorder %s25, 0
      %p157 = por %p155, %p156
      %s159 = sadd.s32 %s158, 1
      %p162 = scmp.eq.s32.totalorder %s19, 1
      %p163 = scmp.ne.s32.totalorder %s158, %s160
      %p164 = scmp.eq.s32.totalorder %s19, 0
      %p165 = por %p163, %p164
      %p166 = scmp.ne.s32.totalorder %s158, %s160
      %p167 = scmp.eq.s32.totalorder %s24, 1
      %p168 = por %p166, %p167
      %p169 = scmp.ne.s32.totalorder %s160, %s161
      %p170 = scmp.eq.s32.totalorder %s24, 0
      %p171 = por %p169, %p170
      %p172 = scmp.ne.s32.totalorder %s160, %s161
      %p173 = scmp.eq.s32.totalorder %s25, 1
      %p174 = por %p172, %p173
      %p176 = scmp.ne.s32.totalorder %s161, %s175
      %p177 = scmp.eq.s32.totalorder %s25, 0
      %p178 = por %p176, %p177
      %s180 = sadd.s32 %s179, 1
      %p183 = scmp.eq.s32.totalorder %s19, 1
      %p184 = scmp.ne.s32.totalorder %s179, %s181
      %p185 = scmp.eq.s32.totalorder %s19, 0
      %p186 = por %p184, %p185
      %p187 = scmp.ne.s32.totalorder %s179, %s181
      %p188 = scmp.eq.s32.totalorder %s24, 1
      %p189 = por %p187, %p188
      %p190 = scmp.ne.s32.totalorder %s181, %s182
      %p191 = scmp.eq.s32.totalorder %s24, 0
      %p192 = por %p190, %p191
      %p193 = scmp.ne.s32.totalorder %s181, %s182
      %p194 = scmp.eq.s32.totalorder %s25, 1
      %p195 = por %p193, %p194
      %p197 = scmp.ne.s32.totalorder %s182, %s196
      %p198 = scmp.eq.s32.totalorder %s25, 0
      %p199 = por %p197, %p198
      %s200 = ssub.s32 %s19, %s26
      %p201 = scmp.eq.s32.totalorder %s200, 0
      %s203 = sadd.s32 %s202, 1
      %s204 = scalar_select %p201, %s202, %s203
      %p207 = pneg %p201
      %p208 = scmp.eq.s32.totalorder %s19, 1
      %p209 = por %p207, %p208
      %p210 = scmp.ne.s32.totalorder %s202, %s205
      %p211 = scmp.eq.s32.totalorder %s19, 0
      %p212 = por %p210, %p211
      %p213 = scmp.ne.s32.totalorder %s202, %s205
      %p214 = scmp.eq.s32.totalorder %s24, 1
      %p215 = por %p213, %p214
      %p216 = scmp.ne.s32.totalorder %s205, %s206
      %p217 = scmp.eq.s32.totalorder %s24, 0
      %p218 = por %p216, %p217
      %p219 = scmp.ne.s32.totalorder %s205, %s206
      %p220 = scmp.eq.s32.totalorder %s25, 1
      %p221 = por %p219, %p220
      %p223 = scmp.ne.s32.totalorder %s206, %s222
      %p224 = scmp.eq.s32.totalorder %s25, 0
      %p225 = por %p223, %p224
      %p226 = scmp.le.s32.totalorder 1, %s19
      %p227 = scmp.lt.s32.totalorder %s19, 3
      %p228 = pnand %p226, %p227
      %p229 = pneg %p228
      // Predicated region
      $region9: #{tpu_custom_call.1} parent=5 // pred_check
        _
      $region10: #{tpu_custom_call.1} parent=5 // pred_check_branch
        %231 = sbr.rel (%p228) target = $region12
      $region11: #{tpu_custom_call.1} parent=5 // pred_region
        %s232 = ssub.s32 %s19, 1
        // Predicated region
        $region13: #{tpu_custom_call.1} parent=11 // pred_check
          %p233 = pneg %p66
        $region14: #{tpu_custom_call.1} parent=11 // pred_check_branch
          %235 = sbr.rel (%p233) target = $region16
        $region15: #{tpu_custom_call.1} parent=11 // pred_region
          _
        $region16: #{tpu_custom_call.1} parent=11 // pred_fallthru
          _
        // Predicated region
        $region17: #{tpu_custom_call.1} parent=11 // pred_check
          %p236 = pneg %p87
        $region18: #{tpu_custom_call.1} parent=11 // pred_check_branch
          %238 = sbr.rel (%p236) target = $region20
        $region19: #{tpu_custom_call.1} parent=11 // pred_region
          _
        $region20: #{tpu_custom_call.1} parent=11 // pred_fallthru
          _
        // Predicated region
        $region21: #{tpu_custom_call.1} parent=11 // pred_check
          %p239 = pneg %p108
        $region22: #{tpu_custom_call.1} parent=11 // pred_check_branch
          %241 = sbr.rel (%p239) target = $region24
        $region23: #{tpu_custom_call.1} parent=11 // pred_region
          _
        $region24: #{tpu_custom_call.1} parent=11 // pred_fallthru
          _
        // Predicated region
        $region25: #{tpu_custom_call.1} parent=11 // pred_check
          %p242 = pneg %p129
        $region26: #{tpu_custom_call.1} parent=11 // pred_check_branch
          %244 = sbr.rel (%p242) target = $region28
        $region27: #{tpu_custom_call.1} parent=11 // pred_region
          %246 = vsyncadd [#allocation3], 0
          %s248 = sshll.u32 %s4, 4
          %s249 = int_to_ptr.hbm [resolvable:$true] %s248
          %s250 = sshll.u32 [#allocation2], 4
          %s251 = int_to_ptr.vmem [resolvable:$true] %s250
          %253 = dma.hbm_to_vmem [thread:$0]  %s249, 128, %s251, [#allocation3]
        $region28: #{tpu_custom_call.1} parent=11 // pred_fallthru
          _
        // Predicated region
        $region29: #{tpu_custom_call.1} parent=11 // pred_check
          %p254 = pneg %p150
        $region30: #{tpu_custom_call.1} parent=11 // pred_check_branch
          %256 = sbr.rel (%p254) target = $region32
        $region31: #{tpu_custom_call.1} parent=11 // pred_region
          %258 = vsyncadd [#allocation6], 0
          %s260 = sshll.u32 %s5, 4
          %s261 = int_to_ptr.hbm [resolvable:$true] %s260
          %s262 = sshll.u32 [#allocation5], 4
          %s263 = int_to_ptr.vmem [resolvable:$true] %s262
          %265 = dma.hbm_to_vmem [thread:$0]  %s261, 128, %s263, [#allocation6]
        $region32: #{tpu_custom_call.1} parent=11 // pred_fallthru
          _
        // Predicated region
        $region33: #{tpu_custom_call.1} parent=11 // pred_check
          %p266 = pneg %p171
        $region34: #{tpu_custom_call.1} parent=11 // pred_check_branch
          %268 = sbr.rel (%p266) target = $region36
        $region35: #{tpu_custom_call.1} parent=11 // pred_region
          _
        $region36: #{tpu_custom_call.1} parent=11 // pred_fallthru
          _
        // Predicated region
        $region37: #{tpu_custom_call.1} parent=11 // pred_check
          %p269 = pneg %p192
        $region38: #{tpu_custom_call.1} parent=11 // pred_check_branch
          %271 = sbr.rel (%p269) target = $region40
        $region39: #{tpu_custom_call.1} parent=11 // pred_region
          _
        $region40: #{tpu_custom_call.1} parent=11 // pred_fallthru
          _
      $region12: #{tpu_custom_call.1} parent=5 // pred_fallthru
        _
      %p272 = scmp.lt.s32.totalorder %s19, 2
      // Predicated region
      $region41: #{tpu_custom_call.1} parent=5 // pred_check
        %p273 = pneg %p272
      $region42: #{tpu_custom_call.1} parent=5 // pred_check_branch
        %275 = sbr.rel (%p273) target = $region44
      $region43: #{tpu_custom_call.1} parent=5 // pred_region
        // Predicated region
        $region45: #{tpu_custom_call.1} parent=43 // pred_check
          %p276 = pneg %p39
        $region46: #{tpu_custom_call.1} parent=43 // pred_check_branch
          %278 = sbr.rel (%p276) target = $region48
        $region47: #{tpu_custom_call.1} parent=43 // pred_region
          %s279 = smul.u32 2, %s19
          %p280 = scmp.lt.s32.totalorder %s279, 3
          %s281 = scalar_select %p280, %s279, 3
          %s282 = smul.addr %s281, 4
          %s283 = scalar_lea.vmem %s0, %s282
          %s284 = smul.u32 2, %s19
        $region48: #{tpu_custom_call.1} parent=43 // pred_fallthru
          _
      $region44: #{tpu_custom_call.1} parent=5 // pred_fallthru
        _
      %p285 = scmp.le.s32.totalorder 1, %s19
      %p286 = scmp.lt.s32.totalorder %s19, 3
      %p287 = pnand %p285, %p286
      %p288 = pneg %p287
      // Predicated region
      $region49: #{tpu_custom_call.1} parent=5 // pred_check
        _
      $region50: #{tpu_custom_call.1} parent=5 // pred_check_branch
        %290 = sbr.rel (%p287) target = $region52
      $region51: #{tpu_custom_call.1} parent=5 // pred_region
        %s291 = ssub.s32 %s19, 1
        // Predicated region
        $region53: #{tpu_custom_call.1} parent=51 // pred_check
          %p292 = pneg %p129
        $region54: #{tpu_custom_call.1} parent=51 // pred_check_branch
          %294 = sbr.rel (%p292) target = $region56
        $region55: #{tpu_custom_call.1} parent=51 // pred_region
          %296 = dma.done [#allocation3], 128
        $region56: #{tpu_custom_call.1} parent=51 // pred_fallthru
          _
        // Predicated region
        $region57: #{tpu_custom_call.1} parent=51 // pred_check
          %p297 = pneg %p150
        $region58: #{tpu_custom_call.1} parent=51 // pred_check_branch
          %299 = sbr.rel (%p297) target = $region60
        $region59: #{tpu_custom_call.1} parent=51 // pred_region
          %301 = dma.done [#allocation6], 128
        $region60: #{tpu_custom_call.1} parent=51 // pred_fallthru
          _
        %s302 = smul.u32 2, %s24
        %p303 = scmp.lt.s32.totalorder %s302, 3
        %s304 = scalar_select %p303, %s302, 3
        %s305 = smul.addr %s304, 4
        %s306 = scalar_lea.vmem %s0, %s305
        %p307 = pneg %p45
        %p308 = pneg %p42
        %p309 = pneg %p66
        %p310 = pneg %p63
        %p311 = pneg %p87
        %p312 = pneg %p84
        %p313 = pneg %p108
        %p314 = pneg %p105
        %p315 = pneg %p129
        %p316 = pneg %p126
        %p317 = pneg %p150
        %p318 = pneg %p147
        %p319 = pneg %p171
        %p320 = pneg %p168
        %p321 = pneg %p192
        %p322 = pneg %p189
        %p323 = pneg %p218
        %p324 = pneg %p215
        %s325 = sand.u32 %s205, 1
        %s326 = scalar_lea.sflag [#allocation4], %s325
        %s327 = sand.u32 %s205, 1
        %s328 = smul.addr %s327, 16
        %s329 = scalar_lea.vmem [#allocation7], %s328
        %s330 = smul.u32 2, %s24
        %p331 = scmp.lt.s32.totalorder %s330, 3
        %s332 = scalar_select %p331, %s330, 3
        %s333 = smul.addr %s332, 4
        %s334 = scalar_lea.vmem %s0, %s333
        %s335 = smul.u32 2, %s24
        %s336 = smul.u32 2, %s24
        %v337 = vld [vmem:[%s7] sm:$0x3]
        %s338 = scalar_lea.vmem %s7, 2
        %v339 = vld [vmem:[%s338] sm:$0x3]
        %s340 = scalar_lea.vmem %s7, 4
        %v341 = vld [vmem:[%s340] sm:$0x3]
        %s342 = scalar_lea.vmem %s7, 6
        %v343 = vld [vmem:[%s342] sm:$0x3]
        %s344 = scalar_lea.vmem %s7, 10
        %v345 = vld [vmem:[%s344] sm:$0x3]
        %s346 = scalar_lea.vmem %s7, 12
        %v347 = vld [vmem:[%s346] sm:$0x3]
        %s348 = scalar_lea.vmem %s7, 14
        %v349 = vld [vmem:[%s348] sm:$0x3]
        %s350 = scalar_lea.vmem %s7, 16
        %v351 = vld [vmem:[%s350] sm:$0x3]
        %v352 = vld [vmem:[%s334] sm:$0xff]
        %v353 = vld [vmem:[%s1] sm:$0xff]
        %v354 = vld [vmem:[%s6] sm:$0xff]
        %356 = vset.pattern.permute.xlu0 0
        %357 = vperm.xlu0 %356, %v354
        %v358 = vpop.permute.xlu0 %357
        %361 = vst [vmem:[#allocation1] ss:$2 sm:$0xff] %v352
        %v362 = vld.sshfl [vmem:[#allocation1] sm:$0xff pattern:$0x75316420]
        %v363 = vld.sshfl [vmem:[#allocation1 + $0x8] sm:$0xff pattern:$0x75316420]
        %vm364 = vcmask 31744
        %v366 = vsel %vm364, %v353, 0
        %vm368 = vcmask 1043456
        %v369 = vsel %vm368, %v362, 0
        %v371 = vsel %vm368, %v363, 0
        %373 = vmatpush.msra.mxu0 0.0
        %374 = vmatpush.msra.mxu0 0.0
        %375 = vmatpush.msra.mxu0 0.0
        %376 = vmatpush.msra.mxu0 0.0
        %377 = vmatpush.msra.mxu0 0.0
        %378 = vmatpush.msra.mxu0 0.0
        %379 = vmatpush.msra.mxu0 0.0
        %380 = vmatpush.msra.mxu0 0.0
        %381 = vmatpush.msra.mxu0 0.0
        %382 = vmatpush.msra.mxu0 0.0
        %383 = vmatpush.msra.mxu0 0.0
        %384 = vmatpush.msra.mxu0 0.0
        %385 = vmatpush.msra.mxu0 0.0
        %386 = vmatpush.msra.mxu0 0.0
        %387 = vmatpush.msra.mxu0 0.0
        %388 = vmatpush.msra.mxu0 %v369
        %389 = vmatmul.f32.gmra.mxu0 %v366
        %v390 = vpop.f32.mrf.mxu0
        %v391 = vadd.f32 %v358, %v390
        %392 = vdwg.mxu0
        %393 = vmatpush.msra.mxu0 0.0
        %394 = vmatpush.msra.mxu0 0.0
        %395 = vmatpush.msra.mxu0 0.0
        %396 = vmatpush.msra.mxu0 0.0
        %397 = vmatpush.msra.mxu0 0.0
        %398 = vmatpush.msra.mxu0 0.0
        %399 = vmatpush.msra.mxu0 0.0
        %400 = vmatpush.msra.mxu0 0.0
        %401 = vmatpush.msra.mxu0 0.0
        %402 = vmatpush.msra.mxu0 0.0
        %403 = vmatpush.msra.mxu0 0.0
        %404 = vmatpush.msra.mxu0 0.0
        %405 = vmatpush.msra.mxu0 0.0
        %406 = vmatpush.msra.mxu0 0.0
        %407 = vmatpush.msra.mxu0 0.0
        %408 = vmatpush.msra.mxu0 %v371
        %409 = vmatmul.f32.gmra.mxu0 %v366
        %v410 = vpop.f32.mrf.mxu0
        %v411 = vadd.f32 %v358, %v410
        %412 = vdwg.mxu0
        %v413 = vmax.f32 %v391, 0.0
        %v414 = vmax.f32 %v411, 0.0
        %415 = vrot.lane.b32.xlu0 %v413, 17
        %v416 = vpop.permute.xlu0 %415
        %417 = vrot.lane.b32.xlu0 %v414, 17
        %v418 = vpop.permute.xlu0 %417
        %v419 = vlaneseq
        %v420 = vand.u32 %v419, 127
        %vm421 = vcmp.lt.s32.totalorder %v420, 17
        %v422 = vsel %vm421, %v416, %v418
        %v423 = vsel %vm421, %v418, %v416
        %v425 = vperm.slane %v337, 0
        %v426 = vperm.slane %v337, 1
        %v429 = vmul.f32 %v423, %v425
        %v430 = vmul.f32 %v422, %v426
        %431 = vrot.lane.b32.xlu0 %v413, 16
        %v432 = vpop.permute.xlu0 %431
        %433 = vrot.lane.b32.xlu0 %v414, 16
        %v434 = vpop.permute.xlu0 %433
        %vm435 = vcmp.lt.s32.totalorder %v420, 16
        %v436 = vsel %vm435, %v432, %v434
        %v437 = vsel %vm435, %v434, %v432
        %v439 = vperm.slane %v339, 0
        %v440 = vperm.slane %v339, 1
        %v443 = vmul.f32 %v437, %v439
        %v444 = vmul.f32 %v436, %v440
        %445 = vrot.lane.b32.xlu0 %v413, 15
        %v446 = vpop.permute.xlu0 %445
        %447 = vrot.lane.b32.xlu0 %v414, 15
        %v448 = vpop.permute.xlu0 %447
        %vm449 = vcmp.lt.s32.totalorder %v420, 15
        %v450 = vsel %vm449, %v446, %v448
        %v451 = vsel %vm449, %v448, %v446
        %v453 = vperm.slane %v341, 0
        %v454 = vperm.slane %v341, 1
        %v457 = vmul.f32 %v451, %v453
        %v458 = vmul.f32 %v450, %v454
        %459 = vrot.lane.b32.xlu0 %v413, 1
        %v460 = vpop.permute.xlu0 %459
        %461 = vrot.lane.b32.xlu0 %v414, 1
        %v462 = vpop.permute.xlu0 %461
        %vm463 = vcmp.lt.s32.totalorder %v420, 1
        %v464 = vsel %vm463, %v460, %v462
        %v465 = vsel %vm463, %v462, %v460
        %v467 = vperm.slane %v343, 0
        %v468 = vperm.slane %v343, 1
        %v471 = vmul.f32 %v465, %v467
        %v472 = vmul.f32 %v464, %v468
        %473 = vrot.lane.b32.xlu0 %v413, 127
        %v474 = vpop.permute.xlu0 %473
        %475 = vrot.lane.b32.xlu0 %v414, 127
        %v476 = vpop.permute.xlu0 %475
        %vm477 = vcmp.lt.s32.totalorder %v420, 127
        %v478 = vsel %vm477, %v474, %v476
        %v479 = vsel %vm477, %v476, %v474
        %v481 = vperm.slane %v345, 0
        %v482 = vperm.slane %v345, 1
        %v485 = vmul.f32 %v478, %v481
        %v486 = vmul.f32 %v479, %v482
        %487 = vrot.lane.b32.xlu0 %v413, 113
        %v488 = vpop.permute.xlu0 %487
        %489 = vrot.lane.b32.xlu0 %v414, 113
        %v490 = vpop.permute.xlu0 %489
        %vm491 = vcmp.lt.s32.totalorder %v420, 113
        %v492 = vsel %vm491, %v488, %v490
        %v493 = vsel %vm491, %v490, %v488
        %v495 = vperm.slane %v347, 0
        %v496 = vperm.slane %v347, 1
        %v499 = vmul.f32 %v492, %v495
        %v500 = vmul.f32 %v493, %v496
        %501 = vrot.lane.b32.xlu0 %v413, 112
        %v502 = vpop.permute.xlu0 %501
        %503 = vrot.lane.b32.xlu0 %v414, 112
        %v504 = vpop.permute.xlu0 %503
        %vm505 = vcmp.lt.s32.totalorder %v420, 112
        %v506 = vsel %vm505, %v502, %v504
        %v507 = vsel %vm505, %v504, %v502
        %v509 = vperm.slane %v349, 0
        %v510 = vperm.slane %v349, 1
        %v513 = vmul.f32 %v506, %v509
        %v514 = vmul.f32 %v507, %v510
        %515 = vrot.lane.b32.xlu0 %v413, 111
        %v516 = vpop.permute.xlu0 %515
        %517 = vrot.lane.b32.xlu0 %v414, 111
        %v518 = vpop.permute.xlu0 %517
        %vm519 = vcmp.lt.s32.totalorder %v420, 111
        %v520 = vsel %vm519, %v516, %v518
        %v521 = vsel %vm519, %v518, %v516
        %v523 = vperm.slane %v351, 0
        %v524 = vperm.slane %v351, 1
        %v527 = vmul.f32 %v520, %v523
        %v528 = vmul.f32 %v521, %v524
        %v529 = vld [vmem:[%s2] sm:$0xff]
        %s530 = scalar_lea.vmem %s6, 8
        %v531 = vld [vmem:[%s530] sm:$0xff]
        %533 = vset.pattern.permute.xlu0 0
        %534 = vperm.xlu0 %533, %v531
        %v535 = vpop.permute.xlu0 %534
        %vm537 = vcmask 588800
        %v539 = vsel %vm537, %v529, 0
        %541 = vmatpush.msra.mxu0 0.0
        %542 = vmatpush.msra.mxu0 0.0
        %543 = vmatpush.msra.mxu0 0.0
        %544 = vmatpush.msra.mxu0 0.0
        %545 = vmatpush.msra.mxu0 0.0
        %546 = vmatpush.msra.mxu0 0.0
        %547 = vmatpush.msra.mxu0 0.0
        %548 = vmatpush.msra.mxu0 %v527
        %549 = vmatpush.msra.mxu0 %v513
        %550 = vmatpush.msra.mxu0 %v499
        %551 = vmatpush.msra.mxu0 %v485
        %552 = vmatpush.msra.mxu0 %v413
        %553 = vmatpush.msra.mxu0 %v471
        %554 = vmatpush.msra.mxu0 %v457
        %555 = vmatpush.msra.mxu0 %v443
        %556 = vmatpush.msra.mxu0 %v429
        %557 = vmatmul.f32.gmra.mxu0 %v539
        %v558 = vpop.f32.mrf.mxu0
        %v559 = vadd.f32 %v535, %v558
        %560 = vdwg.mxu0
        %561 = vmatpush.msra.mxu0 0.0
        %562 = vmatpush.msra.mxu0 0.0
        %563 = vmatpush.msra.mxu0 0.0
        %564 = vmatpush.msra.mxu0 0.0
        %565 = vmatpush.msra.mxu0 0.0
        %566 = vmatpush.msra.mxu0 0.0
        %567 = vmatpush.msra.mxu0 0.0
        %568 = vmatpush.msra.mxu0 %v528
        %569 = vmatpush.msra.mxu0 %v514
        %570 = vmatpush.msra.mxu0 %v500
        %571 = vmatpush.msra.mxu0 %v486
        %572 = vmatpush.msra.mxu0 %v414
        %573 = vmatpush.msra.mxu0 %v472
        %574 = vmatpush.msra.mxu0 %v458
        %575 = vmatpush.msra.mxu0 %v444
        %576 = vmatpush.msra.mxu0 %v430
        %577 = vmatmul.f32.gmra.mxu0 %v539
        %v578 = vpop.f32.mrf.mxu0
        %v579 = vadd.f32 %v535, %v578
        %580 = vdwg.mxu0
        %v581 = vmax.f32 %v559, 0.0
        %v582 = vmax.f32 %v579, 0.0
        %v583 = vld [vmem:[%s3] sm:$0xff]
        %s584 = scalar_lea.vmem %s6, 16
        %v585 = vld [vmem:[%s584] sm:$0xff]
        %587 = vset.pattern.permute.xlu0 0
        %588 = vperm.xlu0 %587, %v585
        %v589 = vpop.permute.xlu0 %588
        %vm591 = vcmask 64512
        %v593 = vsel %vm591, %v583, 0
        %595 = vmatpush.msra.mxu0 0.0
        %596 = vmatpush.msra.mxu0 0.0
        %597 = vmatpush.msra.mxu0 0.0
        %598 = vmatpush.msra.mxu0 0.0
        %599 = vmatpush.msra.mxu0 0.0
        %600 = vmatpush.msra.mxu0 0.0
        %601 = vmatpush.msra.mxu0 0.0
        %602 = vmatpush.msra.mxu0 0.0
        %603 = vmatpush.msra.mxu0 0.0
        %604 = vmatpush.msra.mxu0 0.0
        %605 = vmatpush.msra.mxu0 0.0
        %606 = vmatpush.msra.mxu0 0.0
        %607 = vmatpush.msra.mxu0 0.0
        %608 = vmatpush.msra.mxu0 0.0
        %609 = vmatpush.msra.mxu0 0.0
        %610 = vmatpush.msra.mxu0 %v581
        %611 = vmatmul.f32.gmra.mxu0 %v593
        %v612 = vpop.f32.mrf.mxu0
        %v613 = vadd.f32 %v589, %v612
        %614 = vdwg.mxu0
        %615 = vmatpush.msra.mxu0 0.0
        %616 = vmatpush.msra.mxu0 0.0
        %617 = vmatpush.msra.mxu0 0.0
        %618 = vmatpush.msra.mxu0 0.0
        %619 = vmatpush.msra.mxu0 0.0
        %620 = vmatpush.msra.mxu0 0.0
        %621 = vmatpush.msra.mxu0 0.0
        %622 = vmatpush.msra.mxu0 0.0
        %623 = vmatpush.msra.mxu0 0.0
        %624 = vmatpush.msra.mxu0 0.0
        %625 = vmatpush.msra.mxu0 0.0
        %626 = vmatpush.msra.mxu0 0.0
        %627 = vmatpush.msra.mxu0 0.0
        %628 = vmatpush.msra.mxu0 0.0
        %629 = vmatpush.msra.mxu0 0.0
        %630 = vmatpush.msra.mxu0 %v582
        %631 = vmatmul.f32.gmra.mxu0 %v593
        %v632 = vpop.f32.mrf.mxu0
        %v633 = vadd.f32 %v589, %v632
        %634 = vdwg.mxu0
        %v635 = vmax.f32 %v613, 0.0
        %v636 = vmax.f32 %v633, 0.0
        %v637 = vadd.f32 %v635, %v413
        %v638 = vadd.f32 %v636, %v414
        %639 = vrot.lane.b32.xlu0 %v637, 17
        %v640 = vpop.permute.xlu0 %639
        %641 = vrot.lane.b32.xlu0 %v638, 17
        %v642 = vpop.permute.xlu0 %641
        %v643 = vsel %vm421, %v640, %v642
        %v644 = vsel %vm421, %v642, %v640
        %v645 = vmul.f32 %v644, %v425
        %v646 = vmul.f32 %v643, %v426
        %647 = vrot.lane.b32.xlu0 %v637, 16
        %v648 = vpop.permute.xlu0 %647
        %649 = vrot.lane.b32.xlu0 %v638, 16
        %v650 = vpop.permute.xlu0 %649
        %v651 = vsel %vm435, %v648, %v650
        %v652 = vsel %vm435, %v650, %v648
        %v653 = vmul.f32 %v652, %v439
        %v654 = vmul.f32 %v651, %v440
        %655 = vrot.lane.b32.xlu0 %v637, 15
        %v656 = vpop.permute.xlu0 %655
        %657 = vrot.lane.b32.xlu0 %v638, 15
        %v658 = vpop.permute.xlu0 %657
        %v659 = vsel %vm449, %v656, %v658
        %v660 = vsel %vm449, %v658, %v656
        %v661 = vmul.f32 %v660, %v453
        %v662 = vmul.f32 %v659, %v454
        %663 = vrot.lane.b32.xlu0 %v637, 1
        %v664 = vpop.permute.xlu0 %663
        %665 = vrot.lane.b32.xlu0 %v638, 1
        %v666 = vpop.permute.xlu0 %665
        %v667 = vsel %vm463, %v664, %v666
        %v668 = vsel %vm463, %v666, %v664
        %v669 = vmul.f32 %v668, %v467
        %v670 = vmul.f32 %v667, %v468
        %671 = vrot.lane.b32.xlu0 %v637, 127
        %v672 = vpop.permute.xlu0 %671
        %673 = vrot.lane.b32.xlu0 %v638, 127
        %v674 = vpop.permute.xlu0 %673
        %v675 = vsel %vm477, %v672, %v674
        %v676 = vsel %vm477, %v674, %v672
        %v677 = vmul.f32 %v675, %v481
        %v678 = vmul.f32 %v676, %v482
        %679 = vrot.lane.b32.xlu0 %v637, 113
        %v680 = vpop.permute.xlu0 %679
        %681 = vrot.lane.b32.xlu0 %v638, 113
        %v682 = vpop.permute.xlu0 %681
        %v683 = vsel %vm491, %v680, %v682
        %v684 = vsel %vm491, %v682, %v680
        %v685 = vmul.f32 %v683, %v495
        %v686 = vmul.f32 %v684, %v496
        %687 = vrot.lane.b32.xlu0 %v637, 112
        %v688 = vpop.permute.xlu0 %687
        %689 = vrot.lane.b32.xlu0 %v638, 112
        %v690 = vpop.permute.xlu0 %689
        %v691 = vsel %vm505, %v688, %v690
        %v692 = vsel %vm505, %v690, %v688
        %v693 = vmul.f32 %v691, %v509
        %v694 = vmul.f32 %v692, %v510
        %695 = vrot.lane.b32.xlu0 %v637, 111
        %v696 = vpop.permute.xlu0 %695
        %697 = vrot.lane.b32.xlu0 %v638, 111
        %v698 = vpop.permute.xlu0 %697
        %v699 = vsel %vm519, %v696, %v698
        %v700 = vsel %vm519, %v698, %v696
        %v701 = vmul.f32 %v699, %v523
        %v702 = vmul.f32 %v700, %v524
        %v703 = vld [vmem:[#allocation2] sm:$0xff]
        %s704 = scalar_lea.vmem %s6, 24
        %v705 = vld [vmem:[%s704] sm:$0xff]
        %707 = vset.pattern.permute.xlu0 0
        %708 = vperm.xlu0 %707, %v705
        %v709 = vpop.permute.xlu0 %708
        %v712 = vsel %vm537, %v703, 0
        %714 = vmatpush.msra.mxu0 0.0
        %715 = vmatpush.msra.mxu0 0.0
        %716 = vmatpush.msra.mxu0 0.0
        %717 = vmatpush.msra.mxu0 0.0
        %718 = vmatpush.msra.mxu0 0.0
        %719 = vmatpush.msra.mxu0 0.0
        %720 = vmatpush.msra.mxu0 0.0
        %721 = vmatpush.msra.mxu0 %v701
        %722 = vmatpush.msra.mxu0 %v693
        %723 = vmatpush.msra.mxu0 %v685
        %724 = vmatpush.msra.mxu0 %v677
        %725 = vmatpush.msra.mxu0 %v637
        %726 = vmatpush.msra.mxu0 %v669
        %727 = vmatpush.msra.mxu0 %v661
        %728 = vmatpush.msra.mxu0 %v653
        %729 = vmatpush.msra.mxu0 %v645
        %730 = vmatmul.f32.gmra.mxu0 %v712
        %v731 = vpop.f32.mrf.mxu0
        %v732 = vadd.f32 %v709, %v731
        %733 = vdwg.mxu0
        %734 = vmatpush.msra.mxu0 0.0
        %735 = vmatpush.msra.mxu0 0.0
        %736 = vmatpush.msra.mxu0 0.0
        %737 = vmatpush.msra.mxu0 0.0
        %738 = vmatpush.msra.mxu0 0.0
        %739 = vmatpush.msra.mxu0 0.0
        %740 = vmatpush.msra.mxu0 0.0
        %741 = vmatpush.msra.mxu0 %v702
        %742 = vmatpush.msra.mxu0 %v694
        %743 = vmatpush.msra.mxu0 %v686
        %744 = vmatpush.msra.mxu0 %v678
        %745 = vmatpush.msra.mxu0 %v638
        %746 = vmatpush.msra.mxu0 %v670
        %747 = vmatpush.msra.mxu0 %v662
        %748 = vmatpush.msra.mxu0 %v654
        %749 = vmatpush.msra.mxu0 %v646
        %750 = vmatmul.f32.gmra.mxu0 %v712
        %v751 = vpop.f32.mrf.mxu0
        %v752 = vadd.f32 %v709, %v751
        %753 = vdwg.mxu0
        %v754 = vmax.f32 %v732, 0.0
        %v755 = vmax.f32 %v752, 0.0
        %v756 = vadd.f32 %v754, %v581
        %v757 = vadd.f32 %v755, %v582
        %v758 = vld [vmem:[#allocation5] sm:$0xff]
        %s759 = scalar_lea.vmem %s6, 32
        %v760 = vld [vmem:[%s759] sm:$0xff]
        %762 = vset.pattern.permute.xlu0 0
        %763 = vperm.xlu0 %762, %v760
        %v764 = vpop.permute.xlu0 %763
        %v767 = vsel %vm591, %v758, 0
        %769 = vmatpush.msra.mxu0 0.0
        %770 = vmatpush.msra.mxu0 0.0
        %771 = vmatpush.msra.mxu0 0.0
        %772 = vmatpush.msra.mxu0 0.0
        %773 = vmatpush.msra.mxu0 0.0
        %774 = vmatpush.msra.mxu0 0.0
        %775 = vmatpush.msra.mxu0 0.0
        %776 = vmatpush.msra.mxu0 0.0
        %777 = vmatpush.msra.mxu0 0.0
        %778 = vmatpush.msra.mxu0 0.0
        %779 = vmatpush.msra.mxu0 0.0
        %780 = vmatpush.msra.mxu0 0.0
        %781 = vmatpush.msra.mxu0 0.0
        %782 = vmatpush.msra.mxu0 0.0
        %783 = vmatpush.msra.mxu0 0.0
        %784 = vmatpush.msra.mxu0 %v756
        %785 = vmatmul.f32.gmra.mxu0 %v767
        %v786 = vpop.f32.mrf.mxu0
        %v787 = vadd.f32 %v764, %v786
        %788 = vdwg.mxu0
        %789 = vmatpush.msra.mxu0 0.0
        %790 = vmatpush.msra.mxu0 0.0
        %791 = vmatpush.msra.mxu0 0.0
        %792 = vmatpush.msra.mxu0 0.0
        %793 = vmatpush.msra.mxu0 0.0
        %794 = vmatpush.msra.mxu0 0.0
        %795 = vmatpush.msra.mxu0 0.0
        %796 = vmatpush.msra.mxu0 0.0
        %797 = vmatpush.msra.mxu0 0.0
        %798 = vmatpush.msra.mxu0 0.0
        %799 = vmatpush.msra.mxu0 0.0
        %800 = vmatpush.msra.mxu0 0.0
        %801 = vmatpush.msra.mxu0 0.0
        %802 = vmatpush.msra.mxu0 0.0
        %803 = vmatpush.msra.mxu0 0.0
        %804 = vmatpush.msra.mxu0 %v757
        %805 = vmatmul.f32.gmra.mxu0 %v767
        %v806 = vpop.f32.mrf.mxu0
        %v807 = vadd.f32 %v764, %v806
        %808 = vdwg.mxu0
        %v809 = vmax.f32 %v787, 0.0
        %v810 = vmax.f32 %v807, 0.0
        %811 = vst [vmem:[%s329] sm:$0xff] %v809
        %812 = vst [vmem:[%s329 + $0x8] sm:$0xff] %v810
        %s813 = sand.u32 %s205, 1
        %s814 = scalar_lea.sflag [#allocation4], %s813
        %s815 = sand.u32 %s205, 1
        %s816 = smul.addr %s815, 16
        %s817 = scalar_lea.vmem [#allocation7], %s816
        // Predicated region
        $region61: #{tpu_custom_call.1} parent=51 // pred_check
          %p818 = pneg %p215
        $region62: #{tpu_custom_call.1} parent=51 // pred_check_branch
          %820 = sbr.rel (%p818) target = $region64
        $region63: #{tpu_custom_call.1} parent=51 // pred_region
          %s821 = smul.u32 2, %s24
          %823 = vsyncadd %s814, 0
          %s824 = smul.addr %s821, 8
          %s825 = scalar_lea.hbm %s8, %s824
          %s827 = sshll.u32 %s817, 4
          %s828 = int_to_ptr.vmem [resolvable:$true] %s827
          %s829 = sshll.u32 %s825, 4
          %s830 = int_to_ptr.hbm [resolvable:$true] %s829
          %832 = dma.vmem_to_hbm [thread:$0]  %s828, 256, %s830, %s814
        $region64: #{tpu_custom_call.1} parent=51 // pred_fallthru
          _
      $region52: #{tpu_custom_call.1} parent=5 // pred_fallthru
        _
      %p833 = scmp.le.s32.totalorder 2, %s19
      // Predicated region
      $region65: #{tpu_custom_call.1} parent=5 // pred_check
        %p834 = pneg %p833
      $region66: #{tpu_custom_call.1} parent=5 // pred_check_branch
        %836 = sbr.rel (%p834) target = $region68
      $region67: #{tpu_custom_call.1} parent=5 // pred_region
        %s837 = ssub.s32 %s19, 2
        // Predicated region
        $region69: #{tpu_custom_call.1} parent=67 // pred_check
          %p838 = pneg %p221
        $region70: #{tpu_custom_call.1} parent=67 // pred_check_branch
          %840 = sbr.rel (%p838) target = $region72
        $region71: #{tpu_custom_call.1} parent=67 // pred_region
          %s841 = sand.u32 %s206, 1
          %s842 = scalar_lea.sflag [#allocation4], %s841
          %s843 = sand.u32 %s206, 1
          %s844 = smul.addr %s843, 16
          %s845 = scalar_lea.vmem [#allocation7], %s844
          %847 = dma.done %s842, 256
        $region72: #{tpu_custom_call.1} parent=67 // pred_fallthru
          _
      $region68: #{tpu_custom_call.1} parent=5 // pred_fallthru
        _
    $region6: #{tpu_custom_call.1} parent=1 // loop_footer
      %s23 = sadd.s32 1, %s19
    $region7: #{tpu_custom_call.1} parent=1 // loop_footer_branch
      %18 = sbr.rel target = $region3
    $region8: #{tpu_custom_call.1} parent=1 // loop_exit
      _
    %848 = vsyncpa [#allocation3], 1
    %s849 = scalar_lea.sflag [#allocation3], 1
    %850 = vsyncpa %s849, 1
    %851 = vsyncpa [#allocation6], 1
    %852 = vsyncpa [#allocation4], 1
    %s853 = scalar_lea.sflag [#allocation4], 1
    %854 = vsyncpa %s853, 1

</llo_original>
